<compile_context>
chip_gen: v7x
topology: tpu7x:2x2x1
jax: 0.10.0
libtpu: 0.0.40
codegen_flags: <defaults>
</compile_context>

<pallas_src>
import functools
import math

import jax
import jax.numpy as jnp
from jax.experimental import pallas as pl
from jax.experimental.pallas import tpu as pltpu


def _cross_attention_kernel(x_ref, k_ref, v_ref,
                            wq_ref, bq_ref, wo_ref, bo_ref,
                            o_ref, *, n_heads, skv_valid, skv_pad):
    # Per-grid-step tiles:
    #   x: (1, block_q, E)        k/v: (1, H, Skv_pad, Dh)
    #   wq: (H, E, Dh)  bq: (H, 1, Dh)  wo: (H, Dh, E)  bo: (1, E)
    #   o: (1, block_q, E)
    x = x_ref[0]                              # (block_q, E), compute dtype
    dot_dtype = x.dtype
    block_q = x.shape[0]
    E = wo_ref.shape[2]

    # Additive mask for padded kv columns: a single (1, Skv_pad) row, added
    # with broadcasting (no block_q-replicated f32 array).  Hoisted out of the
    # head loop.
    if skv_pad != skv_valid:
        col = jax.lax.broadcasted_iota(jnp.int32, (1, skv_pad), 1)
        kv_mask = jnp.where(col < skv_valid, 0.0, -1e30).astype(jnp.float32)
    else:
        kv_mask = None

    def head_body(h, out_acc):
        # Q projection for this head (softmax scale pre-folded into wq/bq).
        # Leading-dim dynamic ref indexing is relayout-free; downconvert on
        # MXU result pop via preferred_element_type (no extra VPU casts).
        qh = jnp.dot(x, wq_ref[h], preferred_element_type=dot_dtype) + bq_ref[h]
        kh = k_ref[0, h]                      # (Skv_pad, Dh)
        vh = v_ref[0, h]                      # (Skv_pad, Dh)

        # q k^T — NT matmul over d_head, f32 MXU accumulation.
        logits = jnp.einsum('qd,kd->qk', qh, kh,
                            preferred_element_type=jnp.float32)
        if kv_mask is not None:
            logits = logits + kv_mask

        logits = logits - jnp.max(logits, axis=-1, keepdims=True)
        p = jnp.exp(logits)
        l = jnp.sum(p, axis=-1, keepdims=True)           # (block_q, 1)

        # Deferred normalization: scale the small (block_q, Dh) p@v result,
        # not the (block_q, Skv_pad) probabilities.  Exact reciprocal.
        oh = jnp.dot(p.astype(dot_dtype), vh,
                     preferred_element_type=jnp.float32)  # (block_q, Dh)
        oh = oh * pl.reciprocal(l, approx=False)

        # Head-concat folded into the output projection: accumulate
        # attn_h @ Wo_h into the (block_q, E) f32 accumulator.
        return out_acc + jnp.dot(oh.astype(dot_dtype), wo_ref[h],
                                 preferred_element_type=jnp.float32)

    out_acc = jax.lax.fori_loop(0, n_heads, head_body,
                                jnp.zeros((block_q, E), jnp.float32))
    o_ref[0] = (out_acc + bo_ref[...]).astype(o_ref.dtype)


def _padded_tile_bytes(shape, itemsize):
    """Rough VMEM footprint of a tile: last two dims padded to (8, 128)."""
    if len(shape) == 1:
        return (-(-shape[0] // 128) * 128) * itemsize
    *lead, s, l = shape
    s = -(-s // 8) * 8
    l = -(-l // 128) * 128
    n = 1
    for d in lead:
        n *= d
    return n * s * l * itemsize


def _estimate_vmem_bytes(block_q, e, h, dh, skv_pad, itemsize):
    weights = (_padded_tile_bytes((h, e, dh), itemsize)
               + _padded_tile_bytes((h, 1, dh), itemsize)
               + _padded_tile_bytes((h, dh, e), itemsize)
               + _padded_tile_bytes((1, e), itemsize))                 # 1 buffer
    kv = 2 * 2 * _padded_tile_bytes((h, skv_pad, dh), itemsize)        # K+V, <=2 buf
    xo = 2 * 2 * _padded_tile_bytes((block_q, e), itemsize)            # x+out, 2 buf
    tmp = (3 * _padded_tile_bytes((block_q, skv_pad), 4)               # logits / p
           + _padded_tile_bytes((block_q, e), 4)                       # f32 acc
           + 4 * _padded_tile_bytes((block_q, max(dh, 1)), 4))         # qh / oh
    return weights + kv + xo + tmp


def _vmem_budget_bytes():
    cap = 64 * 1024 * 1024                  # conservative default == v7x per-core
    try:
        cap = int(pltpu.get_tpu_info().vmem_capacity_bytes)
    except Exception:
        pass
    # Leave headroom for compiler-internal scratch; never request full physical.
    return min(cap * 3 // 4, 96 * 1024 * 1024)


def _pick_block_q(sq, sublane_mult, fits_fn):
    """Largest budget-fitting query tile (multiple of the packed sublane tile)."""
    if sq <= sublane_mult:
        return sublane_mult
    cands = [c for c in (1024, 512, 384, 256, 192, 128, 96, 64, 48, 32, 16, 8)
             if c % sublane_mult == 0 and c <= sq]
    fitting = [c for c in cands if fits_fn(c)]
    if not fitting:
        return sublane_mult
    big = [c for c in fitting if c >= 128]
    pool = big if big else fitting
    # Prefer minimal total padded work; break ties towards the larger tile.
    return min(pool, key=lambda c: (-(-sq // c) * c, -c))


def cross_attention(x, y, params, *, n_heads, compute_dtype=None):
    """x: (B, Sq, d_embed), y: (B, Skv, d_cross) -> (B, Sq, d_embed)."""
    B, Sq, E = x.shape
    _, Skv, C = y.shape
    assert E % n_heads == 0
    d_head = E // n_heads
    out_dtype = x.dtype
    compute_dtype = compute_dtype or x.dtype

    wq, bq = params["q"]
    wk, bk = params["k"]
    wv, bv = params["v"]
    wo, bo = params["o"]

    scale = 1.0 / math.sqrt(d_head)

    # --- Host-side (one-time) weight re-layout for the kernel -------------
    wq_h = ((wq.T * scale).reshape(E, n_heads, d_head)
            .transpose(1, 0, 2).astype(compute_dtype))                # (H, E, Dh)
    bq_h = (bq * scale).reshape(n_heads, 1, d_head).astype(compute_dtype)
    wo_h = wo.T.reshape(n_heads, d_head, E).astype(compute_dtype)     # (H, Dh, E)
    bo_2 = bo.reshape(1, E).astype(compute_dtype)

    # --- K/V projections once, as full-width XLA matmuls ------------------
    k = y @ wk.T + bk                                                 # (B, Skv, E)
    v = y @ wv.T + bv
    k_heads = (k.reshape(B, Skv, n_heads, d_head)
               .transpose(0, 2, 1, 3).astype(compute_dtype))          # (B, H, Skv, Dh)
    v_heads = (v.reshape(B, Skv, n_heads, d_head)
               .transpose(0, 2, 1, 3).astype(compute_dtype))

    # Pad Skv to a multiple of 128 (lane-dense logits); padded kv columns are
    # masked additively inside the kernel.
    skv_pad = -(-Skv // 128) * 128
    if skv_pad != Skv:
        pad = ((0, 0), (0, 0), (0, skv_pad - Skv), (0, 0))
        k_heads = jnp.pad(k_heads, pad)
        v_heads = jnp.pad(v_heads, pad)

    x_c = x.astype(compute_dtype)

    # --- Budget-derived query tiling ---------------------------------------
    itemsize = jnp.dtype(compute_dtype).itemsize
    sublane_mult = {4: 8, 2: 16, 1: 32}.get(itemsize, 8)
    budget = _vmem_budget_bytes()

    def fits(bq_cand):
        return _estimate_vmem_bytes(bq_cand, E, n_heads, d_head,
                                    skv_pad, itemsize) <= budget

    block_q = _pick_block_q(Sq, sublane_mult, fits)
    sq_pad = -(-Sq // block_q) * block_q
    if sq_pad != Sq:
        x_c = jnp.pad(x_c, ((0, 0), (0, sq_pad - Sq), (0, 0)))

    est = _estimate_vmem_bytes(block_q, E, n_heads, d_head, skv_pad, itemsize)
    vmem_limit = int(min(budget, max(est * 2, 32 * 1024 * 1024)))

    grid = (B, sq_pad // block_q)
    kernel = functools.partial(_cross_attention_kernel, n_heads=n_heads,
                               skv_valid=Skv, skv_pad=skv_pad)

    def _build(single_buffer_invariants):
        def invariant_spec(shape):
            n = len(shape)
            idx = lambda b, qb: (0,) * n
            if single_buffer_invariants:
                # Grid-invariant: DMA'd once; a second buffer buys nothing.
                return pl.BlockSpec(shape, idx, pipeline_mode=pl.Buffered(1))
            return pl.BlockSpec(shape, idx)

        def kv_spec():
            shape = (1, n_heads, skv_pad, d_head)
            idx = lambda b, qb: (b, 0, 0, 0)
            if single_buffer_invariants:
                # K/V only change once per batch (qb is the inner axis); a
                # second buffer hides one DMA per batch at 2x the VMEM cost.
                return pl.BlockSpec(shape, idx, pipeline_mode=pl.Buffered(1))
            return pl.BlockSpec(shape, idx)

        return pl.pallas_call(
            kernel,
            out_shape=jax.ShapeDtypeStruct((B, sq_pad, E), out_dtype),
            grid_spec=pltpu.PrefetchScalarGridSpec(
                num_scalar_prefetch=0,
                grid=grid,
                in_specs=[
                    pl.BlockSpec((1, block_q, E), lambda b, qb: (b, qb, 0)),  # x
                    kv_spec(),                                                # K heads
                    kv_spec(),                                                # V heads
                    invariant_spec(wq_h.shape),
                    invariant_spec(bq_h.shape),
                    invariant_spec(wo_h.shape),
                    invariant_spec(bo_2.shape),
                ],
                out_specs=pl.BlockSpec((1, block_q, E), lambda b, qb: (b, qb, 0)),
            ),
            compiler_params=pltpu.CompilerParams(
                dimension_semantics=("parallel", "parallel"),
                vmem_limit_bytes=vmem_limit,
            ),
        )

    args = (x_c, k_heads, v_heads, wq_h, bq_h, wo_h, bo_2)
    try:
        out = _build(True)(*args)
    except Exception:
        # Fallback for builds that reject BlockSpec.pipeline_mode / Buffered(1);
        # semantics are identical with default double buffering.
        out = _build(False)(*args)

    if sq_pad != Sq:
        out = out[:, :Sq, :]
    return out


def _reference(x, y, params, *, n_heads):
    """Plain-JAX reference replicating the PyTorch xformers forward path."""
    B, Sq, E = x.shape
    _, Skv, _ = y.shape
    d_head = E // n_heads
    wq, bq = params["q"]
    wk, bk = params["k"]
    wv, bv = params["v"]
    wo, bo = params["o"]

    q = x @ wq.T + bq
    k = y @ wk.T + bk
    v = y @ wv.T + bv
    q = q.reshape(B, Sq, n_heads, d_head).transpose(0, 2, 1, 3)
    k = k.reshape(B, Skv, n_heads, d_head).transpose(0, 2, 1, 3)
    v = v.reshape(B, Skv, n_heads, d_head).transpose(0, 2, 1, 3)
    logits = jnp.einsum("bhqd,bhkd->bhqk", q, k) / math.sqrt(d_head)
    p = jax.nn.softmax(logits, axis=-1)
    o = jnp.einsum("bhqk,bhkd->bhqd", p, v)
    o = o.transpose(0, 2, 1, 3).reshape(B, Sq, E)
    return o @ wo.T + bo


def _init_params(key, d_embed, d_cross):
    ks = jax.random.split(key, 8)

    def lin(kw, kb, out_dim, in_dim):
        bound = 1.0 / math.sqrt(in_dim)
        w = jax.random.uniform(kw, (out_dim, in_dim), jnp.float32, -bound, bound)
        b = jax.random.uniform(kb, (out_dim,), jnp.float32, -bound, bound)
        return w, b

    return {
        "q": lin(ks[0], ks[1], d_embed, d_embed),
        "k": lin(ks[2], ks[3], d_embed, d_cross),
        "v": lin(ks[4], ks[5], d_embed, d_cross),
        "o": lin(ks[6], ks[7], d_embed, d_embed),
    }


if __name__ == "__main__":
    B, Sq, Skv = 2, 8, 8
    n_heads, d_embed, d_cross = 2, 32, 16

    key = jax.random.PRNGKey(0)
    kx, ky, kp = jax.random.split(key, 3)
    x = jax.random.normal(kx, (B, Sq, d_embed), jnp.float32)
    y = jax.random.normal(ky, (B, Skv, d_cross), jnp.float32)
    params = _init_params(kp, d_embed, d_cross)

    out = cross_attention(x, y, params, n_heads=n_heads)
    out = jax.block_until_ready(out)

    ref = _reference(x, y, params, n_heads=n_heads)
    assert out.shape == (B, Sq, d_embed)
    assert jnp.allclose(out, ref, atol=2e-3, rtol=2e-3), "mismatch vs reference"

    print("KERNEL_OK")
</pallas_src>

<mosaic_0001>
module attributes {stable_mosaic.version = 11 : i64} {
  func.func @_cross_attention_kernel(%arg0: i32, %arg1: i32, %arg2: memref<1x8x32xf32, #tpu.memory_space<vmem>>, %arg3: memref<1x2x128x16xf32, #tpu.memory_space<vmem>>, %arg4: memref<1x2x128x16xf32, #tpu.memory_space<vmem>>, %arg5: memref<2x32x16xf32, #tpu.memory_space<vmem>>, %arg6: memref<2x1x16xf32, #tpu.memory_space<vmem>>, %arg7: memref<2x16x32xf32, #tpu.memory_space<vmem>>, %arg8: memref<1x32xf32, #tpu.memory_space<vmem>>, %arg9: memref<1x8x32xf32, #tpu.memory_space<vmem>>) attributes {dimension_semantics = [#tpu.dimension_semantics<parallel>, #tpu.dimension_semantics<parallel>], iteration_bounds = array<i64: 2, 1>, scalar_prefetch = 0 : i64, scratch_operands = 0 : i64, tpu.core_type = #tpu.core_type<tc>, window_params = [{transform_indices = @transform_0, window_bounds = array<i64: 1, 8, 32>}, {pipeline_mode = #tpu.pipeline_mode<synchronous>, transform_indices = @transform_1, window_bounds = array<i64: 1, 2, 128, 16>}, {pipeline_mode = #tpu.pipeline_mode<synchronous>, transform_indices = @transform_2, window_bounds = array<i64: 1, 2, 128, 16>}, {pipeline_mode = #tpu.pipeline_mode<synchronous>, transform_indices = @transform_3, window_bounds = array<i64: 2, 32, 16>}, {pipeline_mode = #tpu.pipeline_mode<synchronous>, transform_indices = @transform_4, window_bounds = array<i64: 2, 1, 16>}, {pipeline_mode = #tpu.pipeline_mode<synchronous>, transform_indices = @transform_5, window_bounds = array<i64: 2, 16, 32>}, {pipeline_mode = #tpu.pipeline_mode<synchronous>, transform_indices = @transform_6, window_bounds = array<i64: 1, 32>}, {transform_indices = @transform_7, window_bounds = array<i64: 1, 8, 32>}]} {
    %c0 = arith.constant 0 : index
    %c0_0 = arith.constant 0 : index
    %c0_1 = arith.constant 0 : index
    %0 = vector.load %arg2[%c0, %c0_0, %c0_1] : memref<1x8x32xf32, #tpu.memory_space<vmem>>, vector<1x8x32xf32>
    %1 = vector.shape_cast %0 : vector<1x8x32xf32> to vector<8x32xf32>
    %2 = tpu.iota {dimensions = array<i32: 1>} : vector<1x128xi32>
    %c8_i32 = arith.constant 8 : i32
    %3 = vector.broadcast %c8_i32 : i32 to vector<1x128xi32>
    %4 = arith.cmpi slt, %2, %3 : vector<1x128xi32>
    %cst = arith.constant 0.000000e+00 : f32
    %cst_2 = arith.constant -1.000000e+30 : f32
    %5 = vector.broadcast %cst : f32 to vector<1x128xf32>
    %6 = vector.broadcast %cst_2 : f32 to vector<1x128xf32>
    %7 = arith.select %4, %5, %6 : vector<1x128xi1>, vector<1x128xf32>
    %cst_3 = arith.constant 0.000000e+00 : f32
    %8 = vector.broadcast %cst_3 : f32 to vector<8x32xf32>
    %c0_i32 = arith.constant 0 : i32
    %c2_i32 = arith.constant 2 : i32
    %9 = arith.addi %c0_i32, %c2_i32 : i32
    %c1_i32 = arith.constant 1 : i32
    %10 = scf.for %arg10 = %c0_i32 to %9 step %c1_i32 iter_args(%arg11 = %8) -> (vector<8x32xf32>)  : i32 {
      %17 = arith.index_cast %arg10 : i32 to index
      %c0_10 = arith.constant 0 : index
      %c0_11 = arith.constant 0 : index
      %18 = vector.load %arg5[%17, %c0_10, %c0_11] : memref<2x32x16xf32, #tpu.memory_space<vmem>>, vector<1x32x16xf32>
      %19 = vector.shape_cast %18 : vector<1x32x16xf32> to vector<32x16xf32>
      %cst_12 = arith.constant dense<0.000000e+00> : vector<8x16xf32>
      %20 = tpu.matmul %1, %19, %cst_12 {dimension_numbers = #tpu.dot_dimension_numbers<[1], [0], [0], [1], [0, 0, 1, 1], [], []>} : vector<8x32xf32>, vector<32x16xf32>, vector<8x16xf32> -> vector<8x16xf32>
      %21 = arith.index_cast %arg10 : i32 to index
      %c0_13 = arith.constant 0 : index
      %c0_14 = arith.constant 0 : index
      %22 = vector.load %arg6[%21, %c0_13, %c0_14] : memref<2x1x16xf32, #tpu.memory_space<vmem>>, vector<1x1x16xf32>
      %23 = vector.shape_cast %22 : vector<1x1x16xf32> to vector<1x16xf32>
      %24 = vector.broadcast %23 : vector<1x16xf32> to vector<8x16xf32>
      %25 = arith.addf %20, %24 : vector<8x16xf32>
      %c0_15 = arith.constant 0 : index
      %26 = arith.index_cast %arg10 : i32 to index
      %c0_16 = arith.constant 0 : index
      %c0_17 = arith.constant 0 : index
      %27 = vector.load %arg3[%c0_15, %26, %c0_16, %c0_17] : memref<1x2x128x16xf32, #tpu.memory_space<vmem>>, vector<1x1x128x16xf32>
      %28 = vector.shape_cast %27 : vector<1x1x128x16xf32> to vector<128x16xf32>
      %c0_18 = arith.constant 0 : index
      %29 = arith.index_cast %arg10 : i32 to index
      %c0_19 = arith.constant 0 : index
      %c0_20 = arith.constant 0 : index
      %30 = vector.load %arg4[%c0_18, %29, %c0_19, %c0_20] : memref<1x2x128x16xf32, #tpu.memory_space<vmem>>, vector<1x1x128x16xf32>
      %31 = vector.shape_cast %30 : vector<1x1x128x16xf32> to vector<128x16xf32>
      "tpu.trace_start"() <{level = 10 : i32, message = "qd,kd->qk"}> : () -> ()
      %cst_21 = arith.constant dense<0.000000e+00> : vector<8x128xf32>
      %32 = tpu.matmul %25, %28, %cst_21 {dimension_numbers = #tpu.dot_dimension_numbers<[1], [1], [0], [0], [0, 0, 1, 0], [], []>} : vector<8x16xf32>, vector<128x16xf32>, vector<8x128xf32> -> vector<8x128xf32>
      "tpu.trace_stop"() : () -> ()
      %33 = vector.broadcast %7 : vector<1x128xf32> to vector<8x128xf32>
      %34 = arith.addf %32, %33 : vector<8x128xf32>
      %cst_22 = arith.constant dense<0xFF800000> : vector<8xf32>
      %35 = vector.multi_reduction <maximumf>, %34, %cst_22 [1] : vector<8x128xf32> to vector<8xf32>
      %36 = vector.shape_cast %35 : vector<8xf32> to vector<8x1xf32>
      %37 = vector.broadcast %36 : vector<8x1xf32> to vector<8x128xf32>
      %38 = arith.subf %34, %37 : vector<8x128xf32>
      %39 = math.exp %38 : vector<8x128xf32>
      %cst_23 = arith.constant dense<0.000000e+00> : vector<8xf32>
      %40 = vector.multi_reduction <add>, %39, %cst_23 [1] : vector<8x128xf32> to vector<8xf32>
      %41 = vector.shape_cast %40 : vector<8xf32> to vector<8x1xf32>
      %cst_24 = arith.constant dense<0.000000e+00> : vector<8x16xf32>
      %42 = tpu.matmul %39, %31, %cst_24 {dimension_numbers = #tpu.dot_dimension_numbers<[1], [0], [0], [1], [0, 0, 1, 1], [], []>} : vector<8x128xf32>, vector<128x16xf32>, vector<8x16xf32> -> vector<8x16xf32>
      %43 = tpu.reciprocal %41 : vector<8x1xf32> -> vector<8x1xf32>
      %44 = vector.broadcast %43 : vector<8x1xf32> to vector<8x16xf32>
      %45 = arith.mulf %42, %44 : vector<8x16xf32>
      %46 = arith.index_cast %arg10 : i32 to index
      %c0_25 = arith.constant 0 : index
      %c0_26 = arith.constant 0 : index
      %47 = vector.load %arg7[%46, %c0_25, %c0_26] : memref<2x16x32xf32, #tpu.memory_space<vmem>>, vector<1x16x32xf32>
      %48 = vector.shape_cast %47 : vector<1x16x32xf32> to vector<16x32xf32>
      %cst_27 = arith.constant dense<0.000000e+00> : vector<8x32xf32>
      %49 = tpu.matmul %45, %48, %cst_27 {dimension_numbers = #tpu.dot_dimension_numbers<[1], [0], [0], [1], [0, 0, 1, 1], [], []>} : vector<8x16xf32>, vector<16x32xf32>, vector<8x32xf32> -> vector<8x32xf32>
      %50 = arith.addf %arg11, %49 : vector<8x32xf32>
      scf.yield %50 : vector<8x32xf32>
    }
    %c2_i32_4 = arith.constant 2 : i32
    %c0_5 = arith.constant 0 : index
    %c0_6 = arith.constant 0 : index
    %11 = vector.load %arg8[%c0_5, %c0_6] : memref<1x32xf32, #tpu.memory_space<vmem>>, vector<1x32xf32>
    %12 = vector.broadcast %11 : vector<1x32xf32> to vector<8x32xf32>
    %13 = arith.addf %10, %12 : vector<8x32xf32>
    %c0_7 = arith.constant 0 : index
    %c0_8 = arith.constant 0 : index
    %c0_9 = arith.constant 0 : index
    %14 = vector.load %arg9[%c0_7, %c0_8, %c0_9] : memref<1x8x32xf32, #tpu.memory_space<vmem>>, vector<1x8x32xf32>
    %15 = vector.shape_cast %14 : vector<1x8x32xf32> to vector<8x32xf32>
    %16 = vector.shape_cast %13 : vector<8x32xf32> to vector<1x8x32xf32>
    tpu.vector_store %arg9[%c0_7, %c0_8, %c0_9], %16 {strides = array<i32>} : memref<1x8x32xf32, #tpu.memory_space<vmem>>, vector<1x8x32xf32>,
    return
  }
  func.func @transform_0(%arg0: i32, %arg1: i32) -> (i32, i32, i32) {
    %c0_i32 = arith.constant 0 : i32
    %c0_i32_0 = arith.constant 0 : i32
    return %arg0, %arg1, %c0_i32 : i32, i32, i32
  }
  func.func @transform_1(%arg0: i32, %arg1: i32) -> (i32, i32, i32, i32) {
    %c0_i32 = arith.constant 0 : i32
    %c0_i32_0 = arith.constant 0 : i32
    %c0_i32_1 = arith.constant 0 : i32
    %c0_i32_2 = arith.constant 0 : i32
    return %arg0, %c0_i32, %c0_i32_0, %c0_i32_1 : i32, i32, i32, i32
  }
  func.func @transform_2(%arg0: i32, %arg1: i32) -> (i32, i32, i32, i32) {
    %c0_i32 = arith.constant 0 : i32
    %c0_i32_0 = arith.constant 0 : i32
    %c0_i32_1 = arith.constant 0 : i32
    %c0_i32_2 = arith.constant 0 : i32
    return %arg0, %c0_i32, %c0_i32_0, %c0_i32_1 : i32, i32, i32, i32
  }
  func.func @transform_3(%arg0: i32, %arg1: i32) -> (i32, i32, i32) {
    %c0_i32 = arith.constant 0 : i32
    %c0_i32_0 = arith.constant 0 : i32
    %c0_i32_1 = arith.constant 0 : i32
    %c0_i32_2 = arith.constant 0 : i32
    return %c0_i32, %c0_i32_0, %c0_i32_1 : i32, i32, i32
  }
  func.func @transform_4(%arg0: i32, %arg1: i32) -> (i32, i32, i32) {
    %c0_i32 = arith.constant 0 : i32
    %c0_i32_0 = arith.constant 0 : i32
    %c0_i32_1 = arith.constant 0 : i32
    %c0_i32_2 = arith.constant 0 : i32
    return %c0_i32, %c0_i32_0, %c0_i32_1 : i32, i32, i32
  }
  func.func @transform_5(%arg0: i32, %arg1: i32) -> (i32, i32, i32) {
    %c0_i32 = arith.constant 0 : i32
    %c0_i32_0 = arith.constant 0 : i32
    %c0_i32_1 = arith.constant 0 : i32
    %c0_i32_2 = arith.constant 0 : i32
    return %c0_i32, %c0_i32_0, %c0_i32_1 : i32, i32, i32
  }
  func.func @transform_6(%arg0: i32, %arg1: i32) -> (i32, i32) {
    %c0_i32 = arith.constant 0 : i32
    %c0_i32_0 = arith.constant 0 : i32
    %c0_i32_1 = arith.constant 0 : i32
    return %c0_i32, %c0_i32_0 : i32, i32
  }
  func.func @transform_7(%arg0: i32, %arg1: i32) -> (i32, i32, i32) {
    %c0_i32 = arith.constant 0 : i32
    %c0_i32_0 = arith.constant 0 : i32
    return %arg0, %arg1, %c0_i32 : i32, i32, i32
  }
}

module attributes {stable_mosaic.version = 11 : i64} {
  func.func @_cross_attention_kernel(%arg0: i32, %arg1: i32, %arg2: memref<1x8x32xf32, #tpu.memory_space<vmem>>, %arg3: memref<1x2x128x16xf32, #tpu.memory_space<vmem>>, %arg4: memref<1x2x128x16xf32, #tpu.memory_space<vmem>>, %arg5: memref<2x32x16xf32, #tpu.memory_space<vmem>>, %arg6: memref<2x1x16xf32, #tpu.memory_space<vmem>>, %arg7: memref<2x16x32xf32, #tpu.memory_space<vmem>>, %arg8: memref<1x32xf32, #tpu.memory_space<vmem>>, %arg9: memref<1x8x32xf32, #tpu.memory_space<vmem>>) attributes {dimension_semantics = [#tpu.dimension_semantics<parallel>, #tpu.dimension_semantics<parallel>], iteration_bounds = array<i64: 2, 1>, scalar_prefetch = 0 : i64, scratch_operands = 0 : i64, tpu.core_type = #tpu.core_type<tc>, window_params = [{transform_indices = @transform_0, window_bounds = array<i64: 1, 8, 32>}, {transform_indices = @transform_1, window_bounds = array<i64: 1, 2, 128, 16>}, {transform_indices = @transform_2, window_bounds = array<i64: 1, 2, 128, 16>}, {pipeline_mode = #tpu.pipeline_mode<synchronous>, transform_indices = @transform_3, window_bounds = array<i64: 2, 32, 16>}, {pipeline_mode = #tpu.pipeline_mode<synchronous>, transform_indices = @transform_4, window_bounds = array<i64: 2, 1, 16>}, {pipeline_mode = #tpu.pipeline_mode<synchronous>, transform_indices = @transform_5, window_bounds = array<i64: 2, 16, 32>}, {pipeline_mode = #tpu.pipeline_mode<synchronous>, transform_indices = @transform_6, window_bounds = array<i64: 1, 32>}, {transform_indices = @transform_7, window_bounds = array<i64: 1, 8, 32>}]} {
    %c0 = arith.constant 0 : index
    %c0_0 = arith.constant 0 : index
    %c0_1 = arith.constant 0 : index
    %0 = vector.load %arg2[%c0, %c0_0, %c0_1] : memref<1x8x32xf32, #tpu.memory_space<vmem>>, vector<1x8x32xf32>
    %1 = vector.shape_cast %0 : vector<1x8x32xf32> to vector<8x32xf32>
    %2 = tpu.iota {dimensions = array<i32: 1>} : vector<1x128xi32>
    %c8_i32 = arith.constant 8 : i32
    %3 = vector.broadcast %c8_i32 : i32 to vector<1x128xi32>
    %4 = arith.cmpi slt, %2, %3 : vector<1x128xi32>
    %cst = arith.constant 0.000000e+00 : f32
    %cst_2 = arith.constant -1.000000e+30 : f32
    %5 = vector.broadcast %cst : f32 to vector<1x128xf32>
    %6 = vector.broadcast %cst_2 : f32 to vector<1x128xf32>
    %7 = arith.select %4, %5, %6 : vector<1x128xi1>, vector<1x128xf32>
    %cst_3 = arith.constant 0.000000e+00 : f32
    %8 = vector.broadcast %cst_3 : f32 to vector<8x32xf32>
    %c0_i32 = arith.constant 0 : i32
    %c2_i32 = arith.constant 2 : i32
    %9 = arith.addi %c0_i32, %c2_i32 : i32
    %c1_i32 = arith.constant 1 : i32
    %10 = scf.for %arg10 = %c0_i32 to %9 step %c1_i32 iter_args(%arg11 = %8) -> (vector<8x32xf32>)  : i32 {
      %17 = arith.index_cast %arg10 : i32 to index
      %c0_10 = arith.constant 0 : index
      %c0_11 = arith.constant 0 : index
      %18 = vector.load %arg5[%17, %c0_10, %c0_11] : memref<2x32x16xf32, #tpu.memory_space<vmem>>, vector<1x32x16xf32>
      %19 = vector.shape_cast %18 : vector<1x32x16xf32> to vector<32x16xf32>
      %cst_12 = arith.constant dense<0.000000e+00> : vector<8x16xf32>
      %20 = tpu.matmul %1, %19, %cst_12 {dimension_numbers = #tpu.dot_dimension_numbers<[1], [0], [0], [1], [0, 0, 1, 1], [], []>} : vector<8x32xf32>, vector<32x16xf32>, vector<8x16xf32> -> vector<8x16xf32>
      %21 = arith.index_cast %arg10 : i32 to index
      %c0_13 = arith.constant 0 : index
      %c0_14 = arith.constant 0 : index
      %22 = vector.load %arg6[%21, %c0_13, %c0_14] : memref<2x1x16xf32, #tpu.memory_space<vmem>>, vector<1x1x16xf32>
      %23 = vector.shape_cast %22 : vector<1x1x16xf32> to vector<1x16xf32>
      %24 = vector.broadcast %23 : vector<1x16xf32> to vector<8x16xf32>
      %25 = arith.addf %20, %24 : vector<8x16xf32>
      %c0_15 = arith.constant 0 : index
      %26 = arith.index_cast %arg10 : i32 to index
      %c0_16 = arith.constant 0 : index
      %c0_17 = arith.constant 0 : index
      %27 = vector.load %arg3[%c0_15, %26, %c0_16, %c0_17] : memref<1x2x128x16xf32, #tpu.memory_space<vmem>>, vector<1x1x128x16xf32>
      %28 = vector.shape_cast %27 : vector<1x1x128x16xf32> to vector<128x16xf32>
      %c0_18 = arith.constant 0 : index
      %29 = arith.index_cast %arg10 : i32 to index
      %c0_19 = arith.constant 0 : index
      %c0_20 = arith.constant 0 : index
      %30 = vector.load %arg4[%c0_18, %29, %c0_19, %c0_20] : memref<1x2x128x16xf32, #tpu.memory_space<vmem>>, vector<1x1x128x16xf32>
      %31 = vector.shape_cast %30 : vector<1x1x128x16xf32> to vector<128x16xf32>
      "tpu.trace_start"() <{level = 10 : i32, message = "qd,kd->qk"}> : () -> ()
      %cst_21 = arith.constant dense<0.000000e+00> : vector<8x128xf32>
      %32 = tpu.matmul %25, %28, %cst_21 {dimension_numbers = #tpu.dot_dimension_numbers<[1], [1], [0], [0], [0, 0, 1, 0], [], []>} : vector<8x16xf32>, vector<128x16xf32>, vector<8x128xf32> -> vector<8x128xf32>
      "tpu.trace_stop"() : () -> ()
      %33 = vector.broadcast %7 : vector<1x128xf32> to vector<8x128xf32>
      %34 = arith.addf %32, %33 : vector<8x128xf32>
      %cst_22 = arith.constant dense<0xFF800000> : vector<8xf32>
      %35 = vector.multi_reduction <maximumf>, %34, %cst_22 [1] : vector<8x128xf32> to vector<8xf32>
      %36 = vector.shape_cast %35 : vector<8xf32> to vector<8x1xf32>
      %37 = vector.broadcast %36 : vector<8x1xf32> to vector<8x128xf32>
      %38 = arith.subf %34, %37 : vector<8x128xf32>
      %39 = math.exp %38 : vector<8x128xf32>
      %cst_23 = arith.constant dense<0.000000e+00> : vector<8xf32>
      %40 = vector.multi_reduction <add>, %39, %cst_23 [1] : vector<8x128xf32> to vector<8xf32>
      %41 = vector.shape_cast %40 : vector<8xf32> to vector<8x1xf32>
      %cst_24 = arith.constant dense<0.000000e+00> : vector<8x16xf32>
      %42 = tpu.matmul %39, %31, %cst_24 {dimension_numbers = #tpu.dot_dimension_numbers<[1], [0], [0], [1], [0, 0, 1, 1], [], []>} : vector<8x128xf32>, vector<128x16xf32>, vector<8x16xf32> -> vector<8x16xf32>
      %43 = tpu.reciprocal %41 : vector<8x1xf32> -> vector<8x1xf32>
      %44 = vector.broadcast %43 : vector<8x1xf32> to vector<8x16xf32>
      %45 = arith.mulf %42, %44 : vector<8x16xf32>
      %46 = arith.index_cast %arg10 : i32 to index
      %c0_25 = arith.constant 0 : index
      %c0_26 = arith.constant 0 : index
      %47 = vector.load %arg7[%46, %c0_25, %c0_26] : memref<2x16x32xf32, #tpu.memory_space<vmem>>, vector<1x16x32xf32>
      %48 = vector.shape_cast %47 : vector<1x16x32xf32> to vector<16x32xf32>
      %cst_27 = arith.constant dense<0.000000e+00> : vector<8x32xf32>
      %49 = tpu.matmul %45, %48, %cst_27 {dimension_numbers = #tpu.dot_dimension_numbers<[1], [0], [0], [1], [0, 0, 1, 1], [], []>} : vector<8x16xf32>, vector<16x32xf32>, vector<8x32xf32> -> vector<8x32xf32>
      %50 = arith.addf %arg11, %49 : vector<8x32xf32>
      scf.yield %50 : vector<8x32xf32>
    }
    %c2_i32_4 = arith.constant 2 : i32
    %c0_5 = arith.constant 0 : index
    %c0_6 = arith.constant 0 : index
    %11 = vector.load %arg8[%c0_5, %c0_6] : memref<1x32xf32, #tpu.memory_space<vmem>>, vector<1x32xf32>
    %12 = vector.broadcast %11 : vector<1x32xf32> to vector<8x32xf32>
    %13 = arith.addf %10, %12 : vector<8x32xf32>
    %c0_7 = arith.constant 0 : index
    %c0_8 = arith.constant 0 : index
    %c0_9 = arith.constant 0 : index
    %14 = vector.load %arg9[%c0_7, %c0_8, %c0_9] : memref<1x8x32xf32, #tpu.memory_space<vmem>>, vector<1x8x32xf32>
    %15 = vector.shape_cast %14 : vector<1x8x32xf32> to vector<8x32xf32>
    %16 = vector.shape_cast %13 : vector<8x32xf32> to vector<1x8x32xf32>
    tpu.vector_store %arg9[%c0_7, %c0_8, %c0_9], %16 {strides = array<i32>} : memref<1x8x32xf32, #tpu.memory_space<vmem>>, vector<1x8x32xf32>,
    return
  }
  func.func @transform_0(%arg0: i32, %arg1: i32) -> (i32, i32, i32) {
    %c0_i32 = arith.constant 0 : i32
    %c0_i32_0 = arith.constant 0 : i32
    return %arg0, %arg1, %c0_i32 : i32, i32, i32
  }
  func.func @transform_1(%arg0: i32, %arg1: i32) -> (i32, i32, i32, i32) {
    %c0_i32 = arith.constant 0 : i32
    %c0_i32_0 = arith.constant 0 : i32
    %c0_i32_1 = arith.constant 0 : i32
    %c0_i32_2 = arith.constant 0 : i32
    return %arg0, %c0_i32, %c0_i32_0, %c0_i32_1 : i32, i32, i32, i32
  }
  func.func @transform_2(%arg0: i32, %arg1: i32) -> (i32, i32, i32, i32) {
    %c0_i32 = arith.constant 0 : i32
    %c0_i32_0 = arith.constant 0 : i32
    %c0_i32_1 = arith.constant 0 : i32
    %c0_i32_2 = arith.constant 0 : i32
    return %arg0, %c0_i32, %c0_i32_0, %c0_i32_1 : i32, i32, i32, i32
  }
  func.func @transform_3(%arg0: i32, %arg1: i32) -> (i32, i32, i32) {
    %c0_i32 = arith.constant 0 : i32
    %c0_i32_0 = arith.constant 0 : i32
    %c0_i32_1 = arith.constant 0 : i32
    %c0_i32_2 = arith.constant 0 : i32
    return %c0_i32, %c0_i32_0, %c0_i32_1 : i32, i32, i32
  }
  func.func @transform_4(%arg0: i32, %arg1: i32) -> (i32, i32, i32) {
    %c0_i32 = arith.constant 0 : i32
    %c0_i32_0 = arith.constant 0 : i32
    %c0_i32_1 = arith.constant 0 : i32
    %c0_i32_2 = arith.constant 0 : i32
    return %c0_i32, %c0_i32_0, %c0_i32_1 : i32, i32, i32
  }
  func.func @transform_5(%arg0: i32, %arg1: i32) -> (i32, i32, i32) {
    %c0_i32 = arith.constant 0 : i32
    %c0_i32_0 = arith.constant 0 : i32
    %c0_i32_1 = arith.constant 0 : i32
    %c0_i32_2 = arith.constant 0 : i32
    return %c0_i32, %c0_i32_0, %c0_i32_1 : i32, i32, i32
  }
  func.func @transform_6(%arg0: i32, %arg1: i32) -> (i32, i32) {
    %c0_i32 = arith.constant 0 : i32
    %c0_i32_0 = arith.constant 0 : i32
    %c0_i32_1 = arith.constant 0 : i32
    return %c0_i32, %c0_i32_0 : i32, i32
  }
  func.func @transform_7(%arg0: i32, %arg1: i32) -> (i32, i32, i32) {
    %c0_i32 = arith.constant 0 : i32
    %c0_i32_0 = arith.constant 0 : i32
    return %arg0, %arg1, %c0_i32 : i32, i32, i32
  }
}

</mosaic_0001>

<llo_original>
// kernel: tpu_custom_call.1
$region0: #{tpu_custom_call.1}
  #allocation0 [shape = 'u32[]', space=smem, size = 0x4, offset = 0x4, fixed_abs, tag = 'smem constant byte address 0x4 - core index']
  #allocation1 [shape = 'u32[144,128]{1,0:T(1,128)}', space=vmem, size = 0x12000, scoped, tag = 'internal scratch']
  %s0 = inlined_call_operand.vmem [shape: f32[2,8,32], index: 0, kind: input, shape index: {}]
  %s1 = inlined_call_operand.vmem [shape: f32[2,2,128,16], index: 1, kind: input, shape index: {}]
  %s2 = inlined_call_operand.vmem [shape: f32[2,2,128,16], index: 2, kind: input, shape index: {}]
  %s3 = inlined_call_operand.vmem [shape: f32[2,32,16], index: 3, kind: input, shape index: {}]
  %s4 = inlined_call_operand.vmem [shape: f32[2,1,16], index: 4, kind: input, shape index: {}]
  %s5 = inlined_call_operand.vmem [shape: f32[2,16,32], index: 5, kind: input, shape index: {}]
  %s6 = inlined_call_operand.vmem [shape: f32[1,32], index: 6, kind: input, shape index: {}]
  %s7 = inlined_call_operand.hbm [shape: f32[2,8,32], index: 7, kind: output, shape index: {}]
  %s8 = sld [smem:[#allocation0]]
  $region68: #{tpu_custom_call.1} parent=0
    _
  %s10 = ssub.s32 1, %s8
  %s11 = scalar_select 0, %s10, %s8
  $region1: #{tpu_custom_call.1} parent=0
    #allocation2 [shape = 'u8[8192]{0}', space=vmem, size = 0x2000, scoped, tag = 'output window, operand 0']
    #allocation3 [shape = 's32[2]{0}', space=sflag, size = 0x8, scoped, tag = 'scoped memory for tpu_custom_call.1']
    %12 = vsyncpa [#allocation3], 0
    %s13 = scalar_lea.sflag [#allocation3], 1
    %14 = vsyncpa %s13, 0
    loop: start=0, step=1, limit=4
    $region2: #{tpu_custom_call.1} parent=1 // loop_pre_header
      _
    $region3: #{tpu_custom_call.1} parent=1 // loop_header
      %s16 = sphi 0, %s20
      %p17 = scmp.ge.s32.totalorder %s16, 4
      %s23 = sphi 0, %s35
      %s24 = sphi 0, %s31
      %s25 = sphi 0, %s23
      %s26 = sphi 0, %s24
      %s27 = sphi 0, %s25
      %s28 = sphi 0, %s26
      %s40 = sphi 0, %s42
      %s43 = sphi 0, %s40
      %s44 = sphi 0, %s43
      %s60 = sphi 0, %s44
      %s66 = sphi 0, %s68
      %s69 = sphi 0, %s66
      %s70 = sphi 0, %s69
      %s86 = sphi 0, %s70
      %s92 = sphi 0, %s94
      %s95 = sphi 0, %s92
      %s96 = sphi 0, %s95
      %s112 = sphi 0, %s96
      %s116 = sphi 0, %s116
      %s118 = sphi 0, %s116
      %s119 = sphi 0, %s118
      %s133 = sphi 0, %s119
      %s137 = sphi 0, %s137
      %s139 = sphi 0, %s137
      %s140 = sphi 0, %s139
      %s154 = sphi 0, %s140
      %s158 = sphi 0, %s158
      %s160 = sphi 0, %s158
      %s161 = sphi 0, %s160
      %s175 = sphi 0, %s161
      %s179 = sphi 0, %s179
      %s181 = sphi 0, %s179
      %s182 = sphi 0, %s181
      %s196 = sphi 0, %s182
      %s204 = sphi 0, %s206
      %s207 = sphi 0, %s204
      %s208 = sphi 0, %s207
      %s224 = sphi 0, %s208
    $region4: #{tpu_custom_call.1} parent=1 // loop_header_branch
      %19 = sbr.rel (%p17) target = $region8
    $region5: #{tpu_custom_call.1} parent=1 // loop_body
      %s21 = ssub.s32 %s16, 1
      %s22 = ssub.s32 %s16, 2
      %s29 = sadd.s32 1, %s24
      %p30 = scmp.ge.s32.totalorder %s29, 1
      %s31 = scalar_select %p30, 0, %s29
      %s32 = sadd.s32 1, %s23
      %s33 = scalar_select %p30, %s32, %s23
      %p34 = scmp.ge.s32.totalorder %s33, 2
      %s35 = scalar_select %p34, 0, %s33
      %s36 = ssub.s32 %s23, %s35
      %s37 = ssub.s32 %s24, %s31
      %s38 = sor.u32 %s36, %s37
      %p39 = scmp.eq.s32.totalorder %s38, 0
      %s41 = sadd.s32 %s40, 1
      %s42 = scalar_select %p39, %s40, %s41
      %p45 = pneg %p39
      %p46 = scmp.eq.s32.totalorder %s16, 1
      %p47 = por %p45, %p46
      %p48 = scmp.ne.s32.totalorder %s40, %s43
      %p49 = scmp.eq.s32.totalorder %s16, 0
      %p50 = por %p48, %p49
      %p51 = scmp.ne.s32.totalorder %s40, %s43
      %p52 = scmp.eq.s32.totalorder %s21, 1
      %p53 = por %p51, %p52
      %p54 = scmp.ne.s32.totalorder %s43, %s44
      %p55 = scmp.eq.s32.totalorder %s21, 0
      %p56 = por %p54, %p55
      %p57 = scmp.ne.s32.totalorder %s43, %s44
      %p58 = scmp.eq.s32.totalorder %s22, 1
      %p59 = por %p57, %p58
      %p61 = scmp.ne.s32.totalorder %s44, %s60
      %p62 = scmp.eq.s32.totalorder %s22, 0
      %p63 = por %p61, %p62
      %s64 = ssub.s32 %s23, %s35
      %p65 = scmp.eq.s32.totalorder %s64, 0
      %s67 = sadd.s32 %s66, 1
      %s68 = scalar_select %p65, %s66, %s67
      %p71 = pneg %p65
      %p72 = scmp.eq.s32.totalorder %s16, 1
      %p73 = por %p71, %p72
      %p74 = scmp.ne.s32.totalorder %s66, %s69
      %p75 = scmp.eq.s32.totalorder %s16, 0
      %p76 = por %p74, %p75
      %p77 = scmp.ne.s32.totalorder %s66, %s69
      %p78 = scmp.eq.s32.totalorder %s21, 1
      %p79 = por %p77, %p78
      %p80 = scmp.ne.s32.totalorder %s69, %s70
      %p81 = scmp.eq.s32.totalorder %s21, 0
      %p82 = por %p80, %p81
      %p83 = scmp.ne.s32.totalorder %s69, %s70
      %p84 = scmp.eq.s32.totalorder %s22, 1
      %p85 = por %p83, %p84
      %p87 = scmp.ne.s32.totalorder %s70, %s86
      %p88 = scmp.eq.s32.totalorder %s22, 0
      %p89 = por %p87, %p88
      %s90 = ssub.s32 %s23, %s35
      %p91 = scmp.eq.s32.totalorder %s90, 0
      %s93 = sadd.s32 %s92, 1
      %s94 = scalar_select %p91, %s92, %s93
      %p97 = pneg %p91
      %p98 = scmp.eq.s32.totalorder %s16, 1
      %p99 = por %p97, %p98
      %p100 = scmp.ne.s32.totalorder %s92, %s95
      %p101 = scmp.eq.s32.totalorder %s16, 0
      %p102 = por %p100, %p101
      %p103 = scmp.ne.s32.totalorder %s92, %s95
      %p104 = scmp.eq.s32.totalorder %s21, 1
      %p105 = por %p103, %p104
      %p106 = scmp.ne.s32.totalorder %s95, %s96
      %p107 = scmp.eq.s32.totalorder %s21, 0
      %p108 = por %p106, %p107
      %p109 = scmp.ne.s32.totalorder %s95, %s96
      %p110 = scmp.eq.s32.totalorder %s22, 1
      %p111 = por %p109, %p110
      %p113 = scmp.ne.s32.totalorder %s96, %s112
      %p114 = scmp.eq.s32.totalorder %s22, 0
      %p115 = por %p113, %p114
      %s117 = sadd.s32 %s116, 1
      %p120 = scmp.eq.s32.totalorder %s16, 1
      %p121 = scmp.ne.s32.totalorder %s116, %s118
      %p122 = scmp.eq.s32.totalorder %s16, 0
      %p123 = por %p121, %p122
      %p124 = scmp.ne.s32.totalorder %s116, %s118
      %p125 = scmp.eq.s32.totalorder %s21, 1
      %p126 = por %p124, %p125
      %p127 = scmp.ne.s32.totalorder %s118, %s119
      %p128 = scmp.eq.s32.totalorder %s21, 0
      %p129 = por %p127, %p128
      %p130 = scmp.ne.s32.totalorder %s118, %s119
      %p131 = scmp.eq.s32.totalorder %s22, 1
      %p132 = por %p130, %p131
      %p134 = scmp.ne.s32.totalorder %s119, %s133
      %p135 = scmp.eq.s32.totalorder %s22, 0
      %p136 = por %p134, %p135
      %s138 = sadd.s32 %s137, 1
      %p141 = scmp.eq.s32.totalorder %s16, 1
      %p142 = scmp.ne.s32.totalorder %s137, %s139
      %p143 = scmp.eq.s32.totalorder %s16, 0
      %p144 = por %p142, %p143
      %p145 = scmp.ne.s32.totalorder %s137, %s139
      %p146 = scmp.eq.s32.totalorder %s21, 1
      %p147 = por %p145, %p146
      %p148 = scmp.ne.s32.totalorder %s139, %s140
      %p149 = scmp.eq.s32.totalorder %s21, 0
      %p150 = por %p148, %p149
      %p151 = scmp.ne.s32.totalorder %s139, %s140
      %p152 = scmp.eq.s32.totalorder %s22, 1
      %p153 = por %p151, %p152
      %p155 = scmp.ne.s32.totalorder %s140, %s154
      %p156 = scmp.eq.s32.totalorder %s22, 0
      %p157 = por %p155, %p156
      %s159 = sadd.s32 %s158, 1
      %p162 = scmp.eq.s32.totalorder %s16, 1
      %p163 = scmp.ne.s32.totalorder %s158, %s160
      %p164 = scmp.eq.s32.totalorder %s16, 0
      %p165 = por %p163, %p164
      %p166 = scmp.ne.s32.totalorder %s158, %s160
      %p167 = scmp.eq.s32.totalorder %s21, 1
      %p168 = por %p166, %p167
      %p169 = scmp.ne.s32.totalorder %s160, %s161
      %p170 = scmp.eq.s32.totalorder %s21, 0
      %p171 = por %p169, %p170
      %p172 = scmp.ne.s32.totalorder %s160, %s161
      %p173 = scmp.eq.s32.totalorder %s22, 1
      %p174 = por %p172, %p173
      %p176 = scmp.ne.s32.totalorder %s161, %s175
      %p177 = scmp.eq.s32.totalorder %s22, 0
      %p178 = por %p176, %p177
      %s180 = sadd.s32 %s179, 1
      %p183 = scmp.eq.s32.totalorder %s16, 1
      %p184 = scmp.ne.s32.totalorder %s179, %s181
      %p185 = scmp.eq.s32.totalorder %s16, 0
      %p186 = por %p184, %p185
      %p187 = scmp.ne.s32.totalorder %s179, %s181
      %p188 = scmp.eq.s32.totalorder %s21, 1
      %p189 = por %p187, %p188
      %p190 = scmp.ne.s32.totalorder %s181, %s182
      %p191 = scmp.eq.s32.totalorder %s21, 0
      %p192 = por %p190, %p191
      %p193 = scmp.ne.s32.totalorder %s181, %s182
      %p194 = scmp.eq.s32.totalorder %s22, 1
      %p195 = por %p193, %p194
      %p197 = scmp.ne.s32.totalorder %s182, %s196
      %p198 = scmp.eq.s32.totalorder %s22, 0
      %p199 = por %p197, %p198
      %s200 = ssub.s32 %s23, %s35
      %s201 = ssub.s32 %s24, %s31
      %s202 = sor.u32 %s200, %s201
      %p203 = scmp.eq.s32.totalorder %s202, 0
      %s205 = sadd.s32 %s204, 1
      %s206 = scalar_select %p203, %s204, %s205
      %p209 = pneg %p203
      %p210 = scmp.eq.s32.totalorder %s16, 1
      %p211 = por %p209, %p210
      %p212 = scmp.ne.s32.totalorder %s204, %s207
      %p213 = scmp.eq.s32.totalorder %s16, 0
      %p214 = por %p212, %p213
      %p215 = scmp.ne.s32.totalorder %s204, %s207
      %p216 = scmp.eq.s32.totalorder %s21, 1
      %p217 = por %p215, %p216
      %p218 = scmp.ne.s32.totalorder %s207, %s208
      %p219 = scmp.eq.s32.totalorder %s21, 0
      %p220 = por %p218, %p219
      %p221 = scmp.ne.s32.totalorder %s207, %s208
      %p222 = scmp.eq.s32.totalorder %s22, 1
      %p223 = por %p221, %p222
      %p225 = scmp.ne.s32.totalorder %s208, %s224
      %p226 = scmp.eq.s32.totalorder %s22, 0
      %p227 = por %p225, %p226
      %p228 = scmp.le.s32.totalorder 1, %s16
      %p229 = scmp.lt.s32.totalorder %s16, 3
      %p230 = pnand %p228, %p229
      %p231 = pneg %p230
      // Predicated region
      $region9: #{tpu_custom_call.1} parent=5 // pred_check
        _
      $region10: #{tpu_custom_call.1} parent=5 // pred_check_branch
        %233 = sbr.rel (%p230) target = $region12
      $region11: #{tpu_custom_call.1} parent=5 // pred_region
        %s234 = ssub.s32 %s16, 1
        // Predicated region
        $region13: #{tpu_custom_call.1} parent=11 // pred_check
          %p235 = pneg %p82
        $region14: #{tpu_custom_call.1} parent=11 // pred_check_branch
          %237 = sbr.rel (%p235) target = $region16
        $region15: #{tpu_custom_call.1} parent=11 // pred_region
          %p238 = scmp.lt.s32.totalorder %s25, 1
          %s239 = scalar_select %p238, %s25, 1
          %s240 = smul.addr %s239, 32
          %s241 = smul.addr %s240, 8
          %s242 = scalar_lea.vmem %s1, %s241
        $region16: #{tpu_custom_call.1} parent=11 // pred_fallthru
          _
        // Predicated region
        $region17: #{tpu_custom_call.1} parent=11 // pred_check
          %p243 = pneg %p108
        $region18: #{tpu_custom_call.1} parent=11 // pred_check_branch
          %245 = sbr.rel (%p243) target = $region20
        $region19: #{tpu_custom_call.1} parent=11 // pred_region
          %p246 = scmp.lt.s32.totalorder %s25, 1
          %s247 = scalar_select %p246, %s25, 1
          %s248 = smul.addr %s247, 32
          %s249 = smul.addr %s248, 8
          %s250 = scalar_lea.vmem %s2, %s249
        $region20: #{tpu_custom_call.1} parent=11 // pred_fallthru
          _
        // Predicated region
        $region21: #{tpu_custom_call.1} parent=11 // pred_check
          %p251 = pneg %p129
        $region22: #{tpu_custom_call.1} parent=11 // pred_check_branch
          %253 = sbr.rel (%p251) target = $region24
        $region23: #{tpu_custom_call.1} parent=11 // pred_region
          _
        $region24: #{tpu_custom_call.1} parent=11 // pred_fallthru
          _
        // Predicated region
        $region25: #{tpu_custom_call.1} parent=11 // pred_check
          %p254 = pneg %p150
        $region26: #{tpu_custom_call.1} parent=11 // pred_check_branch
          %256 = sbr.rel (%p254) target = $region28
        $region27: #{tpu_custom_call.1} parent=11 // pred_region
          _
        $region28: #{tpu_custom_call.1} parent=11 // pred_fallthru
          _
        // Predicated region
        $region29: #{tpu_custom_call.1} parent=11 // pred_check
          %p257 = pneg %p171
        $region30: #{tpu_custom_call.1} parent=11 // pred_check_branch
          %259 = sbr.rel (%p257) target = $region32
        $region31: #{tpu_custom_call.1} parent=11 // pred_region
          _
        $region32: #{tpu_custom_call.1} parent=11 // pred_fallthru
          _
        // Predicated region
        $region33: #{tpu_custom_call.1} parent=11 // pred_check
          %p260 = pneg %p192
        $region34: #{tpu_custom_call.1} parent=11 // pred_check_branch
          %262 = sbr.rel (%p260) target = $region36
        $region35: #{tpu_custom_call.1} parent=11 // pred_region
          _
        $region36: #{tpu_custom_call.1} parent=11 // pred_fallthru
          _
      $region12: #{tpu_custom_call.1} parent=5 // pred_fallthru
        _
      %p263 = scmp.lt.s32.totalorder %s16, 2
      // Predicated region
      $region37: #{tpu_custom_call.1} parent=5 // pred_check
        %p264 = pneg %p263
      $region38: #{tpu_custom_call.1} parent=5 // pred_check_branch
        %266 = sbr.rel (%p264) target = $region40
      $region39: #{tpu_custom_call.1} parent=5 // pred_region
        // Predicated region
        $region41: #{tpu_custom_call.1} parent=39 // pred_check
          %p267 = pneg %p50
        $region42: #{tpu_custom_call.1} parent=39 // pred_check_branch
          %269 = sbr.rel (%p267) target = $region44
        $region43: #{tpu_custom_call.1} parent=39 // pred_region
          %p270 = scmp.lt.s32.totalorder %s23, 1
          %s271 = scalar_select %p270, %s23, 1
          %p272 = scmp.lt.s32.totalorder %s24, 0
          %s273 = scalar_select %p272, %s24, 0
          %s274 = sadd.s32 %s273, %s271
          %s275 = smul.addr %s274, 8
          %s276 = scalar_lea.vmem %s0, %s275
        $region44: #{tpu_custom_call.1} parent=39 // pred_fallthru
          _
      $region40: #{tpu_custom_call.1} parent=5 // pred_fallthru
        _
      %p277 = scmp.le.s32.totalorder 1, %s16
      %p278 = scmp.lt.s32.totalorder %s16, 3
      %p279 = pnand %p277, %p278
      %p280 = pneg %p279
      // Predicated region
      $region45: #{tpu_custom_call.1} parent=5 // pred_check
        _
      $region46: #{tpu_custom_call.1} parent=5 // pred_check_branch
        %282 = sbr.rel (%p279) target = $region48
      $region47: #{tpu_custom_call.1} parent=5 // pred_region
        %s283 = ssub.s32 %s16, 1
        %p284 = scmp.lt.s32.totalorder %s25, 1
        %s285 = scalar_select %p284, %s25, 1
        %p286 = scmp.lt.s32.totalorder %s26, 0
        %s287 = scalar_select %p286, %s26, 0
        %s288 = sadd.s32 %s287, %s285
        %s289 = smul.addr %s288, 8
        %s290 = scalar_lea.vmem %s0, %s289
        %p291 = pneg %p56
        %p292 = pneg %p53
        %p293 = scmp.lt.s32.totalorder %s25, 1
        %s294 = scalar_select %p293, %s25, 1
        %s295 = smul.addr %s294, 32
        %s296 = smul.addr %s295, 8
        %s297 = scalar_lea.vmem %s1, %s296
        %p298 = pneg %p82
        %p299 = pneg %p79
        %p300 = scmp.lt.s32.totalorder %s25, 1
        %s301 = scalar_select %p300, %s25, 1
        %s302 = smul.addr %s301, 32
        %s303 = smul.addr %s302, 8
        %s304 = scalar_lea.vmem %s2, %s303
        %p305 = pneg %p108
        %p306 = pneg %p105
        %p307 = pneg %p129
        %p308 = pneg %p126
        %p309 = pneg %p150
        %p310 = pneg %p147
        %p311 = pneg %p171
        %p312 = pneg %p168
        %p313 = pneg %p192
        %p314 = pneg %p189
        %p315 = pneg %p220
        %p316 = pneg %p217
        %s317 = sand.u32 %s207, 1
        %s318 = scalar_lea.sflag [#allocation3], %s317
        %s319 = sand.u32 %s207, 1
        %s320 = smul.addr %s319, 8
        %s321 = scalar_lea.vmem [#allocation2], %s320
        %p322 = scmp.lt.s32.totalorder %s25, 1
        %s323 = scalar_select %p322, %s25, 1
        %p324 = scmp.lt.s32.totalorder %s26, 0
        %s325 = scalar_select %p324, %s26, 0
        %s326 = sadd.s32 %s325, %s323
        %s327 = smul.addr %s326, 8
        %s328 = scalar_lea.vmem %s0, %s327
        %p329 = scmp.lt.s32.totalorder %s25, 1
        %s330 = scalar_select %p329, %s25, 1
        %s331 = smul.addr %s330, 32
        %s332 = smul.addr %s331, 8
        %s333 = scalar_lea.vmem %s1, %s332
        %p334 = scmp.lt.s32.totalorder %s25, 1
        %s335 = scalar_select %p334, %s25, 1
        %s336 = smul.addr %s335, 32
        %s337 = smul.addr %s336, 8
        %s338 = scalar_lea.vmem %s2, %s337
        %v339 = vld [vmem:[%s328] sm:$0xff]
        %v340 = vlaneseq
        %v341 = vand.u32 %v340, 127
        %vm342 = vcmp.lt.s32.totalorder %v341, 8
        %v343 = vsel %vm342, 0.0, -1e+30
        loop: start=0, step=1, limit=2
        $region49: #{tpu_custom_call.1} parent=47 // loop_pre_header
          _
        $region50: #{tpu_custom_call.1} parent=47 // loop_header
          %s345 = sphi 0, %s349
          %p346 = scmp.ge.s32.totalorder %s345, 2
          %v350 = vphi 0.0, %v752
        $region51: #{tpu_custom_call.1} parent=47 // loop_header_branch
          %348 = sbr.rel (%p346) target = $region55
        $region52: #{tpu_custom_call.1} parent=47 // loop_body
          %s351 = smul.u32 %s345, 32
          %s352 = scalar_lea.vmem %s3, %s351
          %v353 = vld [vmem:[%s352] sm:$0xff]
          %v354 = vld [vmem:[%s352 + $0x8] sm:$0xff]
          %v355 = vld [vmem:[%s352 + $0x10] sm:$0xff]
          %v356 = vld [vmem:[%s352 + $0x18] sm:$0xff]
          %s357 = scalar_lea.vmem %s4, %s345
          %v358 = vld [vmem:[%s357] sm:$0x1]
          %v360 = vlaneseq
          %v361 = vshrl.u32 %v360, 7
          %v362 = vsub.s32 0, %v361
          %v363 = vrot.slane %v358, %v362
          %vm365 = vcmask 261120
          %v367 = vsel %vm365, %v339, 0
          %369 = vmatprep.subr.mxu0 0.0
          %370 = vmatpush1.msra.mxu0 %v353
          %371 = vmatprep.subr.mxu0 0.0
          %372 = vmatpush1.msra.mxu0 %v354
          %373 = vmatprep.subr.mxu0 0.0
          %374 = vmatpush1.msra.mxu0 %v355
          %375 = vmatprep.subr.mxu0 0.0
          %376 = vmatpush1.msra.mxu0 %v356
          %377 = vmatprep.subr.mxu0 0.0
          %378 = vmatpush1.msra.mxu0 0.0
          %379 = vmatprep.subr.mxu0 0.0
          %380 = vmatpush1.msra.mxu0 0.0
          %381 = vmatprep.subr.mxu0 0.0
          %382 = vmatpush1.msra.mxu0 0.0
          %383 = vmatprep.subr.mxu0 0.0
          %384 = vmatpush1.msra.mxu0 0.0
          %385 = vmatprep.subr.mxu0 0.0
          %386 = vmatpush1.msra.mxu0 0.0
          %387 = vmatprep.subr.mxu0 0.0
          %388 = vmatpush1.msra.mxu0 0.0
          %389 = vmatprep.subr.mxu0 0.0
          %390 = vmatpush1.msra.mxu0 0.0
          %391 = vmatprep.subr.mxu0 0.0
          %392 = vmatpush1.msra.mxu0 0.0
          %393 = vmatprep.subr.mxu0 0.0
          %394 = vmatpush1.msra.mxu0 0.0
          %395 = vmatprep.subr.mxu0 0.0
          %396 = vmatpush1.msra.mxu0 0.0
          %397 = vmatprep.subr.mxu0 0.0
          %398 = vmatpush1.msra.mxu0 0.0
          %399 = vmatprep.subr.mxu0 0.0
          %400 = vmatpush1.msra.mxu0 0.0
          %401 = vmatprep.subr.mxu0 0.0
          %402 = vmatpush1.msra.mxu0 0.0
          %403 = vmatprep.subr.mxu0 0.0
          %404 = vmatpush1.msra.mxu0 0.0
          %405 = vmatprep.subr.mxu0 0.0
          %406 = vmatpush1.msra.mxu0 0.0
          %407 = vmatprep.subr.mxu0 0.0
          %408 = vmatpush1.msra.mxu0 0.0
          %409 = vmatprep.subr.mxu0 0.0
          %410 = vmatpush1.msra.mxu0 0.0
          %411 = vmatprep.subr.mxu0 0.0
          %412 = vmatpush1.msra.mxu0 0.0
          %413 = vmatprep.subr.mxu0 0.0
          %414 = vmatpush1.msra.mxu0 0.0
          %415 = vmatprep.subr.mxu0 0.0
          %416 = vmatpush1.msra.mxu0 0.0
          %417 = vmatprep.subr.mxu0 0.0
          %418 = vmatpush1.msra.mxu0 0.0
          %419 = vmatprep.subr.mxu0 0.0
          %420 = vmatpush1.msra.mxu0 0.0
          %421 = vmatprep.subr.mxu0 0.0
          %422 = vmatpush1.msra.mxu0 0.0
          %423 = vmatprep.subr.mxu0 0.0
          %424 = vmatpush1.msra.mxu0 0.0
          %425 = vmatprep.subr.mxu0 0.0
          %426 = vmatpush1.msra.mxu0 0.0
          %427 = vmatprep.subr.mxu0 0.0
          %428 = vmatpush1.msra.mxu0 0.0
          %429 = vmatprep.subr.mxu0 0.0
          %430 = vmatpush1.msra.mxu0 0.0
          %431 = vmatprep.subr.mxu0 0.0
          %432 = vmatpush1.msra.mxu0 0.0
          %433 = vmatprep.mubr.f32.mxu0 0.0
          %434 = vmatmul.mubr.f32.gmra.mrb[0].mxu0 %v367
          %v435 = vpop.f32.mrb[0].mxu0
          %v436 = vadd.f32 %v363, %v435
          %v437 = vpop.f32.mrb[0].mxu0
          %438 = vdwg.mxu0
          %s439 = smul.u32 %s345, 128
          %s440 = scalar_lea.vmem %s333, %s439
          %v441 = vld [vmem:[%s440] sm:$0xff]
          %v442 = vld [vmem:[%s440 + $0x8] sm:$0xff]
          %v443 = vld [vmem:[%s440 + $0x10] sm:$0xff]
          %v444 = vld [vmem:[%s440 + $0x18] sm:$0xff]
          %v445 = vld [vmem:[%s440 + $0x20] sm:$0xff]
          %v446 = vld [vmem:[%s440 + $0x28] sm:$0xff]
          %v447 = vld [vmem:[%s440 + $0x30] sm:$0xff]
          %v448 = vld [vmem:[%s440 + $0x38] sm:$0xff]
          %v449 = vld [vmem:[%s440 + $0x40] sm:$0xff]
          %v450 = vld [vmem:[%s440 + $0x48] sm:$0xff]
          %v451 = vld [vmem:[%s440 + $0x50] sm:$0xff]
          %v452 = vld [vmem:[%s440 + $0x58] sm:$0xff]
          %v453 = vld [vmem:[%s440 + $0x60] sm:$0xff]
          %v454 = vld [vmem:[%s440 + $0x68] sm:$0xff]
          %v455 = vld [vmem:[%s440 + $0x70] sm:$0xff]
          %v456 = vld [vmem:[%s440 + $0x78] sm:$0xff]
          %s457 = scalar_lea.vmem %s338, %s439
          %v458 = vld [vmem:[%s457] sm:$0xff]
          %v459 = vld [vmem:[%s457 + $0x8] sm:$0xff]
          %v460 = vld [vmem:[%s457 + $0x10] sm:$0xff]
          %v461 = vld [vmem:[%s457 + $0x18] sm:$0xff]
          %v462 = vld [vmem:[%s457 + $0x20] sm:$0xff]
          %v463 = vld [vmem:[%s457 + $0x28] sm:$0xff]
          %v464 = vld [vmem:[%s457 + $0x30] sm:$0xff]
          %v465 = vld [vmem:[%s457 + $0x38] sm:$0xff]
          %v466 = vld [vmem:[%s457 + $0x40] sm:$0xff]
          %v467 = vld [vmem:[%s457 + $0x48] sm:$0xff]
          %v468 = vld [vmem:[%s457 + $0x50] sm:$0xff]
          %v469 = vld [vmem:[%s457 + $0x58] sm:$0xff]
          %v470 = vld [vmem:[%s457 + $0x60] sm:$0xff]
          %v471 = vld [vmem:[%s457 + $0x68] sm:$0xff]
          %v472 = vld [vmem:[%s457 + $0x70] sm:$0xff]
          %v473 = vld [vmem:[%s457 + $0x78] sm:$0xff]
          %vm474 = vcmask 130048
          %v476 = vsel %vm474, %v436, 0
          %v479 = vsel %vm474, %v441, 0
          %v482 = vsel %vm474, %v442, 0
          %v485 = vsel %vm474, %v443, 0
          %v488 = vsel %vm474, %v444, 0
          %v491 = vsel %vm474, %v445, 0
          %v494 = vsel %vm474, %v446, 0
          %v497 = vsel %vm474, %v447, 0
          %v500 = vsel %vm474, %v448, 0
          %v503 = vsel %vm474, %v449, 0
          %v506 = vsel %vm474, %v450, 0
          %v509 = vsel %vm474, %v451, 0
          %v512 = vsel %vm474, %v452, 0
          %v515 = vsel %vm474, %v453, 0
          %v518 = vsel %vm474, %v454, 0
          %v521 = vsel %vm474, %v455, 0
          %v524 = vsel %vm474, %v456, 0
          %526 = vmatprep.subr.mxu0 0.0
          %527 = vmatpush1.xpose.msra.mxu0 %v479
          %528 = vmatprep.subr.mxu0 0.0
          %529 = vmatpush1.xpose.msra.mxu0 %v482
          %530 = vmatprep.subr.mxu0 0.0
          %531 = vmatpush1.xpose.msra.mxu0 %v485
          %532 = vmatprep.subr.mxu0 0.0
          %533 = vmatpush1.xpose.msra.mxu0 %v488
          %534 = vmatprep.subr.mxu0 0.0
          %535 = vmatpush1.xpose.msra.mxu0 %v491
          %536 = vmatprep.subr.mxu0 0.0
          %537 = vmatpush1.xpose.msra.mxu0 %v494
          %538 = vmatprep.subr.mxu0 0.0
          %539 = vmatpush1.xpose.msra.mxu0 %v497
          %540 = vmatprep.subr.mxu0 0.0
          %541 = vmatpush1.xpose.msra.mxu0 %v500
          %542 = vmatprep.subr.mxu0 0.0
          %543 = vmatpush1.xpose.msra.mxu0 %v503
          %544 = vmatprep.subr.mxu0 0.0
          %545 = vmatpush1.xpose.msra.mxu0 %v506
          %546 = vmatprep.subr.mxu0 0.0
          %547 = vmatpush1.xpose.msra.mxu0 %v509
          %548 = vmatprep.subr.mxu0 0.0
          %549 = vmatpush1.xpose.msra.mxu0 %v512
          %550 = vmatprep.subr.mxu0 0.0
          %551 = vmatpush1.xpose.msra.mxu0 %v515
          %552 = vmatprep.subr.mxu0 0.0
          %553 = vmatpush1.xpose.msra.mxu0 %v518
          %554 = vmatprep.subr.mxu0 0.0
          %555 = vmatpush1.xpose.msra.mxu0 %v521
          %556 = vmatprep.subr.mxu0 0.0
          %557 = vmatpush1.xpose.msra.mxu0 %v524
          %558 = vmatprep.subr.mxu0 0.0
          %559 = vmatpush1.xpose.msra.mxu0 0.0
          %560 = vmatprep.subr.mxu0 0.0
          %561 = vmatpush1.xpose.msra.mxu0 0.0
          %562 = vmatprep.subr.mxu0 0.0
          %563 = vmatpush1.xpose.msra.mxu0 0.0
          %564 = vmatprep.subr.mxu0 0.0
          %565 = vmatpush1.xpose.msra.mxu0 0.0
          %566 = vmatprep.subr.mxu0 0.0
          %567 = vmatpush1.xpose.msra.mxu0 0.0
          %568 = vmatprep.subr.mxu0 0.0
          %569 = vmatpush1.xpose.msra.mxu0 0.0
          %570 = vmatprep.subr.mxu0 0.0
          %571 = vmatpush1.xpose.msra.mxu0 0.0
          %572 = vmatprep.subr.mxu0 0.0
          %573 = vmatpush1.xpose.msra.mxu0 0.0
          %574 = vmatprep.subr.mxu0 0.0
          %575 = vmatpush1.xpose.msra.mxu0 0.0
          %576 = vmatprep.subr.mxu0 0.0
          %577 = vmatpush1.xpose.msra.mxu0 0.0
          %578 = vmatprep.subr.mxu0 0.0
          %579 = vmatpush1.xpose.msra.mxu0 0.0
          %580 = vmatprep.subr.mxu0 0.0
          %581 = vmatpush1.xpose.msra.mxu0 0.0
          %582 = vmatprep.subr.mxu0 0.0
          %583 = vmatpush1.xpose.msra.mxu0 0.0
          %584 = vmatprep.subr.mxu0 0.0
          %585 = vmatpush1.xpose.msra.mxu0 0.0
          %586 = vmatprep.subr.mxu0 0.0
          %587 = vmatpush1.xpose.msra.mxu0 0.0
          %588 = vmatprep.subr.mxu0 0.0
          %589 = vmatpush1.xpose.msra.mxu0 0.0
          %590 = vmatprep.mubr.f32.mxu0 0.0
          %591 = vmatmul.mubr.f32.gmra.mrb[0].mxu0 %v476
          %v592 = vpop.f32.mrb[0].mxu0
          %v593 = vadd.f32 %v343, %v592
          %v594 = vpop.f32.mrb[0].mxu0
          %595 = vdwg.mxu0
          %596 = vmax.xlane.f32.xlu0 %v593
          %v597 = vpop.xlane.xlu0 %596
          %v598 = vsub.f32 %v593, %v597
          %v599 = vmul.f32 %v598, 1.442695
          %v600 = vpow.pop %v599
          %601 = vadd.xlane.f32.xlu0 %v600
          %v602 = vpop.xlane.xlu0 %601
          %603 = vmatprep.subr.mxu0 0.0
          %604 = vmatpush1.msra.mxu0 %v458
          %605 = vmatprep.subr.mxu0 0.0
          %606 = vmatpush1.msra.mxu0 %v459
          %607 = vmatprep.subr.mxu0 0.0
          %608 = vmatpush1.msra.mxu0 %v460
          %609 = vmatprep.subr.mxu0 0.0
          %610 = vmatpush1.msra.mxu0 %v461
          %611 = vmatprep.subr.mxu0 0.0
          %612 = vmatpush1.msra.mxu0 %v462
          %613 = vmatprep.subr.mxu0 0.0
          %614 = vmatpush1.msra.mxu0 %v463
          %615 = vmatprep.subr.mxu0 0.0
          %616 = vmatpush1.msra.mxu0 %v464
          %617 = vmatprep.subr.mxu0 0.0
          %618 = vmatpush1.msra.mxu0 %v465
          %619 = vmatprep.subr.mxu0 0.0
          %620 = vmatpush1.msra.mxu0 %v466
          %621 = vmatprep.subr.mxu0 0.0
          %622 = vmatpush1.msra.mxu0 %v467
          %623 = vmatprep.subr.mxu0 0.0
          %624 = vmatpush1.msra.mxu0 %v468
          %625 = vmatprep.subr.mxu0 0.0
          %626 = vmatpush1.msra.mxu0 %v469
          %627 = vmatprep.subr.mxu0 0.0
          %628 = vmatpush1.msra.mxu0 %v470
          %629 = vmatprep.subr.mxu0 0.0
          %630 = vmatpush1.msra.mxu0 %v471
          %631 = vmatprep.subr.mxu0 0.0
          %632 = vmatpush1.msra.mxu0 %v472
          %633 = vmatprep.subr.mxu0 0.0
          %634 = vmatpush1.msra.mxu0 %v473
          %635 = vmatprep.subr.mxu0 0.0
          %636 = vmatpush1.msra.mxu0 0.0
          %637 = vmatprep.subr.mxu0 0.0
          %638 = vmatpush1.msra.mxu0 0.0
          %639 = vmatprep.subr.mxu0 0.0
          %640 = vmatpush1.msra.mxu0 0.0
          %641 = vmatprep.subr.mxu0 0.0
          %642 = vmatpush1.msra.mxu0 0.0
          %643 = vmatprep.subr.mxu0 0.0
          %644 = vmatpush1.msra.mxu0 0.0
          %645 = vmatprep.subr.mxu0 0.0
          %646 = vmatpush1.msra.mxu0 0.0
          %647 = vmatprep.subr.mxu0 0.0
          %648 = vmatpush1.msra.mxu0 0.0
          %649 = vmatprep.subr.mxu0 0.0
          %650 = vmatpush1.msra.mxu0 0.0
          %651 = vmatprep.subr.mxu0 0.0
          %652 = vmatpush1.msra.mxu0 0.0
          %653 = vmatprep.subr.mxu0 0.0
          %654 = vmatpush1.msra.mxu0 0.0
          %655 = vmatprep.subr.mxu0 0.0
          %656 = vmatpush1.msra.mxu0 0.0
          %657 = vmatprep.subr.mxu0 0.0
          %658 = vmatpush1.msra.mxu0 0.0
          %659 = vmatprep.subr.mxu0 0.0
          %660 = vmatpush1.msra.mxu0 0.0
          %661 = vmatprep.subr.mxu0 0.0
          %662 = vmatpush1.msra.mxu0 0.0
          %663 = vmatprep.subr.mxu0 0.0
          %664 = vmatpush1.msra.mxu0 0.0
          %665 = vmatprep.subr.mxu0 0.0
          %666 = vmatpush1.msra.mxu0 0.0
          %667 = vmatprep.mubr.f32.mxu0 0.0
          %668 = vmatmul.mubr.f32.gmra.mrb[0].mxu0 %v600
          %v669 = vpop.f32.mrb[0].mxu0
          %v670 = vadd.f32 0.0, %v669
          %v671 = vpop.f32.mrb[0].mxu0
          %672 = vdwg.mxu0
          %v673 = vrcp.pop %v602
          %v674 = vmul.f32 %v670, %v673
          %s675 = smul.u32 %s345, 16
          %s676 = scalar_lea.vmem %s5, %s675
          %v677 = vld [vmem:[%s676] sm:$0xff]
          %v678 = vld [vmem:[%s676 + $0x8] sm:$0xff]
          %v680 = vsel %vm474, %v674, 0
          %682 = vmatprep.subr.mxu0 0.0
          %683 = vmatpush1.msra.mxu0 %v677
          %684 = vmatprep.subr.mxu0 0.0
          %685 = vmatpush1.msra.mxu0 %v678
          %686 = vmatprep.subr.mxu0 0.0
          %687 = vmatpush1.msra.mxu0 0.0
          %688 = vmatprep.subr.mxu0 0.0
          %689 = vmatpush1.msra.mxu0 0.0
          %690 = vmatprep.subr.mxu0 0.0
          %691 = vmatpush1.msra.mxu0 0.0
          %692 = vmatprep.subr.mxu0 0.0
          %693 = vmatpush1.msra.mxu0 0.0
          %694 = vmatprep.subr.mxu0 0.0
          %695 = vmatpush1.msra.mxu0 0.0
          %696 = vmatprep.subr.mxu0 0.0
          %697 = vmatpush1.msra.mxu0 0.0
          %698 = vmatprep.subr.mxu0 0.0
          %699 = vmatpush1.msra.mxu0 0.0
          %700 = vmatprep.subr.mxu0 0.0
          %701 = vmatpush1.msra.mxu0 0.0
          %702 = vmatprep.subr.mxu0 0.0
          %703 = vmatpush1.msra.mxu0 0.0
          %704 = vmatprep.subr.mxu0 0.0
          %705 = vmatpush1.msra.mxu0 0.0
          %706 = vmatprep.subr.mxu0 0.0
          %707 = vmatpush1.msra.mxu0 0.0
          %708 = vmatprep.subr.mxu0 0.0
          %709 = vmatpush1.msra.mxu0 0.0
          %710 = vmatprep.subr.mxu0 0.0
          %711 = vmatpush1.msra.mxu0 0.0
          %712 = vmatprep.subr.mxu0 0.0
          %713 = vmatpush1.msra.mxu0 0.0
          %714 = vmatprep.subr.mxu0 0.0
          %715 = vmatpush1.msra.mxu0 0.0
          %716 = vmatprep.subr.mxu0 0.0
          %717 = vmatpush1.msra.mxu0 0.0
          %718 = vmatprep.subr.mxu0 0.0
          %719 = vmatpush1.msra.mxu0 0.0
          %720 = vmatprep.subr.mxu0 0.0
          %721 = vmatpush1.msra.mxu0 0.0
          %722 = vmatprep.subr.mxu0 0.0
          %723 = vmatpush1.msra.mxu0 0.0
          %724 = vmatprep.subr.mxu0 0.0
          %725 = vmatpush1.msra.mxu0 0.0
          %726 = vmatprep.subr.mxu0 0.0
          %727 = vmatpush1.msra.mxu0 0.0
          %728 = vmatprep.subr.mxu0 0.0
          %729 = vmatpush1.msra.mxu0 0.0
          %730 = vmatprep.subr.mxu0 0.0
          %731 = vmatpush1.msra.mxu0 0.0
          %732 = vmatprep.subr.mxu0 0.0
          %733 = vmatpush1.msra.mxu0 0.0
          %734 = vmatprep.subr.mxu0 0.0
          %735 = vmatpush1.msra.mxu0 0.0
          %736 = vmatprep.subr.mxu0 0.0
          %737 = vmatpush1.msra.mxu0 0.0
          %738 = vmatprep.subr.mxu0 0.0
          %739 = vmatpush1.msra.mxu0 0.0
          %740 = vmatprep.subr.mxu0 0.0
          %741 = vmatpush1.msra.mxu0 0.0
          %742 = vmatprep.subr.mxu0 0.0
          %743 = vmatpush1.msra.mxu0 0.0
          %744 = vmatprep.subr.mxu0 0.0
          %745 = vmatpush1.msra.mxu0 0.0
          %746 = vmatprep.mubr.f32.mxu0 0.0
          %747 = vmatmul.mubr.f32.gmra.mrb[0].mxu0 %v680
          %v748 = vpop.f32.mrb[0].mxu0
          %v749 = vadd.f32 0.0, %v748
          %v750 = vpop.f32.mrb[0].mxu0
          %751 = vdwg.mxu0
          %v752 = vadd.f32 %v350, %v749
        $region53: #{tpu_custom_call.1} parent=47 // loop_footer
          %s349 = sadd.s32 1, %s345
        $region54: #{tpu_custom_call.1} parent=47 // loop_footer_branch
          %344 = sbr.rel target = $region50
        $region55: #{tpu_custom_call.1} parent=47 // loop_exit
          _
        %v753 = vld [vmem:[%s6] sm:$0x1]
        %v755 = vlaneseq
        %v756 = vshrl.u32 %v755, 7
        %v757 = vsub.s32 0, %v756
        %v758 = vrot.slane %v753, %v757
        %v760 = vadd.f32 %v350, %v758
        %vm761 = vcmask 261120
        %762 = vst.msk [vmem:[%s321] sm:$0xff] %vm761, %v760
        %s763 = sand.u32 %s207, 1
        %s764 = scalar_lea.sflag [#allocation3], %s763
        %s765 = sand.u32 %s207, 1
        %s766 = smul.addr %s765, 8
        %s767 = scalar_lea.vmem [#allocation2], %s766
        // Predicated region
        $region56: #{tpu_custom_call.1} parent=47 // pred_check
          %p768 = pneg %p217
        $region57: #{tpu_custom_call.1} parent=47 // pred_check_branch
          %770 = sbr.rel (%p768) target = $region59
        $region58: #{tpu_custom_call.1} parent=47 // pred_region
          %s772 = ssub.s32 128, 128
          %773 = vsyncadd %s764, %s772
          %s774 = sadd.s32 %s26, %s25
          %s775 = smul.addr %s774, 128
          %s776 = scalar_lea.hbm %s7, %s775
          %s778 = sshll.u32 %s767, 4
          %s779 = int_to_ptr.vmem [resolvable:$true] %s778
          %781 = dma.vmem_to_hbm [thread:$0]  %s779, 128, %s776, %s764
        $region59: #{tpu_custom_call.1} parent=47 // pred_fallthru
          _
      $region48: #{tpu_custom_call.1} parent=5 // pred_fallthru
        _
      %p782 = scmp.le.s32.totalorder 2, %s16
      // Predicated region
      $region60: #{tpu_custom_call.1} parent=5 // pred_check
        %p783 = pneg %p782
      $region61: #{tpu_custom_call.1} parent=5 // pred_check_branch
        %785 = sbr.rel (%p783) target = $region63
      $region62: #{tpu_custom_call.1} parent=5 // pred_region
        %s786 = ssub.s32 %s16, 2
        // Predicated region
        $region64: #{tpu_custom_call.1} parent=62 // pred_check
          %p787 = pneg %p223
        $region65: #{tpu_custom_call.1} parent=62 // pred_check_branch
          %789 = sbr.rel (%p787) target = $region67
        $region66: #{tpu_custom_call.1} parent=62 // pred_region
          %s790 = sand.u32 %s208, 1
          %s791 = scalar_lea.sflag [#allocation3], %s790
          %s792 = sand.u32 %s208, 1
          %s793 = smul.addr %s792, 8
          %s794 = scalar_lea.vmem [#allocation2], %s793
          %795 = dma.done %s791, 128
        $region67: #{tpu_custom_call.1} parent=62 // pred_fallthru
          _
      $region63: #{tpu_custom_call.1} parent=5 // pred_fallthru
        _
    $region6: #{tpu_custom_call.1} parent=1 // loop_footer
      %s20 = sadd.s32 1, %s16
    $region7: #{tpu_custom_call.1} parent=1 // loop_footer_branch
      %15 = sbr.rel target = $region3
    $region8: #{tpu_custom_call.1} parent=1 // loop_exit
      _
    %796 = vsyncpa [#allocation3], 1
    %s797 = scalar_lea.sflag [#allocation3], 1
    %798 = vsyncpa %s797, 1

// kernel: tpu_custom_call.1
$region0: #{tpu_custom_call.1}
  #allocation0 [shape = 'u32[]', space=smem, size = 0x4, offset = 0x4, fixed_abs, tag = 'smem constant byte address 0x4 - core index']
  #allocation1 [shape = 'u32[144,128]{1,0:T(1,128)}', space=vmem, size = 0x12000, scoped, tag = 'internal scratch']
  %s0 = inlined_call_operand.vmem [shape: f32[2,8,32], index: 0, kind: input, shape index: {}]
  %s1 = inlined_call_operand.vmem [shape: f32[2,2,128,16], index: 1, kind: input, shape index: {}]
  %s2 = inlined_call_operand.vmem [shape: f32[2,2,128,16], index: 2, kind: input, shape index: {}]
  %s3 = inlined_call_operand.vmem [shape: f32[2,32,16], index: 3, kind: input, shape index: {}]
  %s4 = inlined_call_operand.vmem [shape: f32[2,1,16], index: 4, kind: input, shape index: {}]
  %s5 = inlined_call_operand.vmem [shape: f32[2,16,32], index: 5, kind: input, shape index: {}]
  %s6 = inlined_call_operand.vmem [shape: f32[1,32], index: 6, kind: input, shape index: {}]
  %s7 = inlined_call_operand.hbm [shape: f32[2,8,32], index: 7, kind: output, shape index: {}]
  %s8 = sld [smem:[#allocation0]]
  $region68: #{tpu_custom_call.1} parent=0
    _
  %s10 = ssub.s32 1, %s8
  %s11 = scalar_select 0, %s10, %s8
  $region1: #{tpu_custom_call.1} parent=0
    #allocation2 [shape = 'u8[8192]{0}', space=vmem, size = 0x2000, scoped, tag = 'output window, operand 0']
    #allocation3 [shape = 's32[2]{0}', space=sflag, size = 0x8, scoped, tag = 'scoped memory for tpu_custom_call.1']
    %12 = vsyncpa [#allocation3], 0
    %s13 = scalar_lea.sflag [#allocation3], 1
    %14 = vsyncpa %s13, 0
    loop: start=0, step=1, limit=4
    $region2: #{tpu_custom_call.1} parent=1 // loop_pre_header
      _
    $region3: #{tpu_custom_call.1} parent=1 // loop_header
      %s16 = sphi 0, %s20
      %p17 = scmp.ge.s32.totalorder %s16, 4
      %s23 = sphi 0, %s35
      %s24 = sphi 0, %s31
      %s25 = sphi 0, %s23
      %s26 = sphi 0, %s24
      %s27 = sphi 0, %s25
      %s28 = sphi 0, %s26
      %s40 = sphi 0, %s42
      %s43 = sphi 0, %s40
      %s44 = sphi 0, %s43
      %s60 = sphi 0, %s44
      %s66 = sphi 0, %s68
      %s69 = sphi 0, %s66
      %s70 = sphi 0, %s69
      %s86 = sphi 0, %s70
      %s92 = sphi 0, %s94
      %s95 = sphi 0, %s92
      %s96 = sphi 0, %s95
      %s112 = sphi 0, %s96
      %s116 = sphi 0, %s116
      %s118 = sphi 0, %s116
      %s119 = sphi 0, %s118
      %s133 = sphi 0, %s119
      %s137 = sphi 0, %s137
      %s139 = sphi 0, %s137
      %s140 = sphi 0, %s139
      %s154 = sphi 0, %s140
      %s158 = sphi 0, %s158
      %s160 = sphi 0, %s158
      %s161 = sphi 0, %s160
      %s175 = sphi 0, %s161
      %s179 = sphi 0, %s179
      %s181 = sphi 0, %s179
      %s182 = sphi 0, %s181
      %s196 = sphi 0, %s182
      %s204 = sphi 0, %s206
      %s207 = sphi 0, %s204
      %s208 = sphi 0, %s207
      %s224 = sphi 0, %s208
    $region4: #{tpu_custom_call.1} parent=1 // loop_header_branch
      %19 = sbr.rel (%p17) target = $region8
    $region5: #{tpu_custom_call.1} parent=1 // loop_body
      %s21 = ssub.s32 %s16, 1
      %s22 = ssub.s32 %s16, 2
      %s29 = sadd.s32 1, %s24
      %p30 = scmp.ge.s32.totalorder %s29, 1
      %s31 = scalar_select %p30, 0, %s29
      %s32 = sadd.s32 1, %s23
      %s33 = scalar_select %p30, %s32, %s23
      %p34 = scmp.ge.s32.totalorder %s33, 2
      %s35 = scalar_select %p34, 0, %s33
      %s36 = ssub.s32 %s23, %s35
      %s37 = ssub.s32 %s24, %s31
      %s38 = sor.u32 %s36, %s37
      %p39 = scmp.eq.s32.totalorder %s38, 0
      %s41 = sadd.s32 %s40, 1
      %s42 = scalar_select %p39, %s40, %s41
      %p45 = pneg %p39
      %p46 = scmp.eq.s32.totalorder %s16, 1
      %p47 = por %p45, %p46
      %p48 = scmp.ne.s32.totalorder %s40, %s43
      %p49 = scmp.eq.s32.totalorder %s16, 0
      %p50 = por %p48, %p49
      %p51 = scmp.ne.s32.totalorder %s40, %s43
      %p52 = scmp.eq.s32.totalorder %s21, 1
      %p53 = por %p51, %p52
      %p54 = scmp.ne.s32.totalorder %s43, %s44
      %p55 = scmp.eq.s32.totalorder %s21, 0
      %p56 = por %p54, %p55
      %p57 = scmp.ne.s32.totalorder %s43, %s44
      %p58 = scmp.eq.s32.totalorder %s22, 1
      %p59 = por %p57, %p58
      %p61 = scmp.ne.s32.totalorder %s44, %s60
      %p62 = scmp.eq.s32.totalorder %s22, 0
      %p63 = por %p61, %p62
      %s64 = ssub.s32 %s23, %s35
      %p65 = scmp.eq.s32.totalorder %s64, 0
      %s67 = sadd.s32 %s66, 1
      %s68 = scalar_select %p65, %s66, %s67
      %p71 = pneg %p65
      %p72 = scmp.eq.s32.totalorder %s16, 1
      %p73 = por %p71, %p72
      %p74 = scmp.ne.s32.totalorder %s66, %s69
      %p75 = scmp.eq.s32.totalorder %s16, 0
      %p76 = por %p74, %p75
      %p77 = scmp.ne.s32.totalorder %s66, %s69
      %p78 = scmp.eq.s32.totalorder %s21, 1
      %p79 = por %p77, %p78
      %p80 = scmp.ne.s32.totalorder %s69, %s70
      %p81 = scmp.eq.s32.totalorder %s21, 0
      %p82 = por %p80, %p81
      %p83 = scmp.ne.s32.totalorder %s69, %s70
      %p84 = scmp.eq.s32.totalorder %s22, 1
      %p85 = por %p83, %p84
      %p87 = scmp.ne.s32.totalorder %s70, %s86
      %p88 = scmp.eq.s32.totalorder %s22, 0
      %p89 = por %p87, %p88
      %s90 = ssub.s32 %s23, %s35
      %p91 = scmp.eq.s32.totalorder %s90, 0
      %s93 = sadd.s32 %s92, 1
      %s94 = scalar_select %p91, %s92, %s93
      %p97 = pneg %p91
      %p98 = scmp.eq.s32.totalorder %s16, 1
      %p99 = por %p97, %p98
      %p100 = scmp.ne.s32.totalorder %s92, %s95
      %p101 = scmp.eq.s32.totalorder %s16, 0
      %p102 = por %p100, %p101
      %p103 = scmp.ne.s32.totalorder %s92, %s95
      %p104 = scmp.eq.s32.totalorder %s21, 1
      %p105 = por %p103, %p104
      %p106 = scmp.ne.s32.totalorder %s95, %s96
      %p107 = scmp.eq.s32.totalorder %s21, 0
      %p108 = por %p106, %p107
      %p109 = scmp.ne.s32.totalorder %s95, %s96
      %p110 = scmp.eq.s32.totalorder %s22, 1
      %p111 = por %p109, %p110
      %p113 = scmp.ne.s32.totalorder %s96, %s112
      %p114 = scmp.eq.s32.totalorder %s22, 0
      %p115 = por %p113, %p114
      %s117 = sadd.s32 %s116, 1
      %p120 = scmp.eq.s32.totalorder %s16, 1
      %p121 = scmp.ne.s32.totalorder %s116, %s118
      %p122 = scmp.eq.s32.totalorder %s16, 0
      %p123 = por %p121, %p122
      %p124 = scmp.ne.s32.totalorder %s116, %s118
      %p125 = scmp.eq.s32.totalorder %s21, 1
      %p126 = por %p124, %p125
      %p127 = scmp.ne.s32.totalorder %s118, %s119
      %p128 = scmp.eq.s32.totalorder %s21, 0
      %p129 = por %p127, %p128
      %p130 = scmp.ne.s32.totalorder %s118, %s119
      %p131 = scmp.eq.s32.totalorder %s22, 1
      %p132 = por %p130, %p131
      %p134 = scmp.ne.s32.totalorder %s119, %s133
      %p135 = scmp.eq.s32.totalorder %s22, 0
      %p136 = por %p134, %p135
      %s138 = sadd.s32 %s137, 1
      %p141 = scmp.eq.s32.totalorder %s16, 1
      %p142 = scmp.ne.s32.totalorder %s137, %s139
      %p143 = scmp.eq.s32.totalorder %s16, 0
      %p144 = por %p142, %p143
      %p145 = scmp.ne.s32.totalorder %s137, %s139
      %p146 = scmp.eq.s32.totalorder %s21, 1
      %p147 = por %p145, %p146
      %p148 = scmp.ne.s32.totalorder %s139, %s140
      %p149 = scmp.eq.s32.totalorder %s21, 0
      %p150 = por %p148, %p149
      %p151 = scmp.ne.s32.totalorder %s139, %s140
      %p152 = scmp.eq.s32.totalorder %s22, 1
      %p153 = por %p151, %p152
      %p155 = scmp.ne.s32.totalorder %s140, %s154
      %p156 = scmp.eq.s32.totalorder %s22, 0
      %p157 = por %p155, %p156
      %s159 = sadd.s32 %s158, 1
      %p162 = scmp.eq.s32.totalorder %s16, 1
      %p163 = scmp.ne.s32.totalorder %s158, %s160
      %p164 = scmp.eq.s32.totalorder %s16, 0
      %p165 = por %p163, %p164
      %p166 = scmp.ne.s32.totalorder %s158, %s160
      %p167 = scmp.eq.s32.totalorder %s21, 1
      %p168 = por %p166, %p167
      %p169 = scmp.ne.s32.totalorder %s160, %s161
      %p170 = scmp.eq.s32.totalorder %s21, 0
      %p171 = por %p169, %p170
      %p172 = scmp.ne.s32.totalorder %s160, %s161
      %p173 = scmp.eq.s32.totalorder %s22, 1
      %p174 = por %p172, %p173
      %p176 = scmp.ne.s32.totalorder %s161, %s175
      %p177 = scmp.eq.s32.totalorder %s22, 0
      %p178 = por %p176, %p177
      %s180 = sadd.s32 %s179, 1
      %p183 = scmp.eq.s32.totalorder %s16, 1
      %p184 = scmp.ne.s32.totalorder %s179, %s181
      %p185 = scmp.eq.s32.totalorder %s16, 0
      %p186 = por %p184, %p185
      %p187 = scmp.ne.s32.totalorder %s179, %s181
      %p188 = scmp.eq.s32.totalorder %s21, 1
      %p189 = por %p187, %p188
      %p190 = scmp.ne.s32.totalorder %s181, %s182
      %p191 = scmp.eq.s32.totalorder %s21, 0
      %p192 = por %p190, %p191
      %p193 = scmp.ne.s32.totalorder %s181, %s182
      %p194 = scmp.eq.s32.totalorder %s22, 1
      %p195 = por %p193, %p194
      %p197 = scmp.ne.s32.totalorder %s182, %s196
      %p198 = scmp.eq.s32.totalorder %s22, 0
      %p199 = por %p197, %p198
      %s200 = ssub.s32 %s23, %s35
      %s201 = ssub.s32 %s24, %s31
      %s202 = sor.u32 %s200, %s201
      %p203 = scmp.eq.s32.totalorder %s202, 0
      %s205 = sadd.s32 %s204, 1
      %s206 = scalar_select %p203, %s204, %s205
      %p209 = pneg %p203
      %p210 = scmp.eq.s32.totalorder %s16, 1
      %p211 = por %p209, %p210
      %p212 = scmp.ne.s32.totalorder %s204, %s207
      %p213 = scmp.eq.s32.totalorder %s16, 0
      %p214 = por %p212, %p213
      %p215 = scmp.ne.s32.totalorder %s204, %s207
      %p216 = scmp.eq.s32.totalorder %s21, 1
      %p217 = por %p215, %p216
      %p218 = scmp.ne.s32.totalorder %s207, %s208
      %p219 = scmp.eq.s32.totalorder %s21, 0
      %p220 = por %p218, %p219
      %p221 = scmp.ne.s32.totalorder %s207, %s208
      %p222 = scmp.eq.s32.totalorder %s22, 1
      %p223 = por %p221, %p222
      %p225 = scmp.ne.s32.totalorder %s208, %s224
      %p226 = scmp.eq.s32.totalorder %s22, 0
      %p227 = por %p225, %p226
      %p228 = scmp.le.s32.totalorder 1, %s16
      %p229 = scmp.lt.s32.totalorder %s16, 3
      %p230 = pnand %p228, %p229
      %p231 = pneg %p230
      // Predicated region
      $region9: #{tpu_custom_call.1} parent=5 // pred_check
        _
      $region10: #{tpu_custom_call.1} parent=5 // pred_check_branch
        %233 = sbr.rel (%p230) target = $region12
      $region11: #{tpu_custom_call.1} parent=5 // pred_region
        %s234 = ssub.s32 %s16, 1
        // Predicated region
        $region13: #{tpu_custom_call.1} parent=11 // pred_check
          %p235 = pneg %p129
        $region14: #{tpu_custom_call.1} parent=11 // pred_check_branch
          %237 = sbr.rel (%p235) target = $region16
        $region15: #{tpu_custom_call.1} parent=11 // pred_region
          _
        $region16: #{tpu_custom_call.1} parent=11 // pred_fallthru
          _
        // Predicated region
        $region17: #{tpu_custom_call.1} parent=11 // pred_check
          %p238 = pneg %p150
        $region18: #{tpu_custom_call.1} parent=11 // pred_check_branch
          %240 = sbr.rel (%p238) target = $region20
        $region19: #{tpu_custom_call.1} parent=11 // pred_region
          _
        $region20: #{tpu_custom_call.1} parent=11 // pred_fallthru
          _
        // Predicated region
        $region21: #{tpu_custom_call.1} parent=11 // pred_check
          %p241 = pneg %p171
        $region22: #{tpu_custom_call.1} parent=11 // pred_check_branch
          %243 = sbr.rel (%p241) target = $region24
        $region23: #{tpu_custom_call.1} parent=11 // pred_region
          _
        $region24: #{tpu_custom_call.1} parent=11 // pred_fallthru
          _
        // Predicated region
        $region25: #{tpu_custom_call.1} parent=11 // pred_check
          %p244 = pneg %p192
        $region26: #{tpu_custom_call.1} parent=11 // pred_check_branch
          %246 = sbr.rel (%p244) target = $region28
        $region27: #{tpu_custom_call.1} parent=11 // pred_region
          _
        $region28: #{tpu_custom_call.1} parent=11 // pred_fallthru
          _
      $region12: #{tpu_custom_call.1} parent=5 // pred_fallthru
        _
      %p247 = scmp.lt.s32.totalorder %s16, 2
      // Predicated region
      $region29: #{tpu_custom_call.1} parent=5 // pred_check
        %p248 = pneg %p247
      $region30: #{tpu_custom_call.1} parent=5 // pred_check_branch
        %250 = sbr.rel (%p248) target = $region32
      $region31: #{tpu_custom_call.1} parent=5 // pred_region
        // Predicated region
        $region33: #{tpu_custom_call.1} parent=31 // pred_check
          %p251 = pneg %p50
        $region34: #{tpu_custom_call.1} parent=31 // pred_check_branch
          %253 = sbr.rel (%p251) target = $region36
        $region35: #{tpu_custom_call.1} parent=31 // pred_region
          %p254 = scmp.lt.s32.totalorder %s23, 1
          %s255 = scalar_select %p254, %s23, 1
          %p256 = scmp.lt.s32.totalorder %s24, 0
          %s257 = scalar_select %p256, %s24, 0
          %s258 = sadd.s32 %s257, %s255
          %s259 = smul.addr %s258, 8
          %s260 = scalar_lea.vmem %s0, %s259
        $region36: #{tpu_custom_call.1} parent=31 // pred_fallthru
          _
        // Predicated region
        $region37: #{tpu_custom_call.1} parent=31 // pred_check
          %p261 = pneg %p76
        $region38: #{tpu_custom_call.1} parent=31 // pred_check_branch
          %263 = sbr.rel (%p261) target = $region40
        $region39: #{tpu_custom_call.1} parent=31 // pred_region
          %p264 = scmp.lt.s32.totalorder %s23, 1
          %s265 = scalar_select %p264, %s23, 1
          %s266 = smul.addr %s265, 32
          %s267 = smul.addr %s266, 8
          %s268 = scalar_lea.vmem %s1, %s267
        $region40: #{tpu_custom_call.1} parent=31 // pred_fallthru
          _
        // Predicated region
        $region41: #{tpu_custom_call.1} parent=31 // pred_check
          %p269 = pneg %p102
        $region42: #{tpu_custom_call.1} parent=31 // pred_check_branch
          %271 = sbr.rel (%p269) target = $region44
        $region43: #{tpu_custom_call.1} parent=31 // pred_region
          %p272 = scmp.lt.s32.totalorder %s23, 1
          %s273 = scalar_select %p272, %s23, 1
          %s274 = smul.addr %s273, 32
          %s275 = smul.addr %s274, 8
          %s276 = scalar_lea.vmem %s2, %s275
        $region44: #{tpu_custom_call.1} parent=31 // pred_fallthru
          _
      $region32: #{tpu_custom_call.1} parent=5 // pred_fallthru
        _
      %p277 = scmp.le.s32.totalorder 1, %s16
      %p278 = scmp.lt.s32.totalorder %s16, 3
      %p279 = pnand %p277, %p278
      %p280 = pneg %p279
      // Predicated region
      $region45: #{tpu_custom_call.1} parent=5 // pred_check
        _
      $region46: #{tpu_custom_call.1} parent=5 // pred_check_branch
        %282 = sbr.rel (%p279) target = $region48
      $region47: #{tpu_custom_call.1} parent=5 // pred_region
        %s283 = ssub.s32 %s16, 1
        %p284 = scmp.lt.s32.totalorder %s25, 1
        %s285 = scalar_select %p284, %s25, 1
        %p286 = scmp.lt.s32.totalorder %s26, 0
        %s287 = scalar_select %p286, %s26, 0
        %s288 = sadd.s32 %s287, %s285
        %s289 = smul.addr %s288, 8
        %s290 = scalar_lea.vmem %s0, %s289
        %p291 = pneg %p56
        %p292 = pneg %p53
        %p293 = scmp.lt.s32.totalorder %s25, 1
        %s294 = scalar_select %p293, %s25, 1
        %s295 = smul.addr %s294, 32
        %s296 = smul.addr %s295, 8
        %s297 = scalar_lea.vmem %s1, %s296
        %p298 = pneg %p82
        %p299 = pneg %p79
        %p300 = scmp.lt.s32.totalorder %s25, 1
        %s301 = scalar_select %p300, %s25, 1
        %s302 = smul.addr %s301, 32
        %s303 = smul.addr %s302, 8
        %s304 = scalar_lea.vmem %s2, %s303
        %p305 = pneg %p108
        %p306 = pneg %p105
        %p307 = pneg %p129
        %p308 = pneg %p126
        %p309 = pneg %p150
        %p310 = pneg %p147
        %p311 = pneg %p171
        %p312 = pneg %p168
        %p313 = pneg %p192
        %p314 = pneg %p189
        %p315 = pneg %p220
        %p316 = pneg %p217
        %s317 = sand.u32 %s207, 1
        %s318 = scalar_lea.sflag [#allocation3], %s317
        %s319 = sand.u32 %s207, 1
        %s320 = smul.addr %s319, 8
        %s321 = scalar_lea.vmem [#allocation2], %s320
        %p322 = scmp.lt.s32.totalorder %s25, 1
        %s323 = scalar_select %p322, %s25, 1
        %p324 = scmp.lt.s32.totalorder %s26, 0
        %s325 = scalar_select %p324, %s26, 0
        %s326 = sadd.s32 %s325, %s323
        %s327 = smul.addr %s326, 8
        %s328 = scalar_lea.vmem %s0, %s327
        %p329 = scmp.lt.s32.totalorder %s25, 1
        %s330 = scalar_select %p329, %s25, 1
        %s331 = smul.addr %s330, 32
        %s332 = smul.addr %s331, 8
        %s333 = scalar_lea.vmem %s1, %s332
        %p334 = scmp.lt.s32.totalorder %s25, 1
        %s335 = scalar_select %p334, %s25, 1
        %s336 = smul.addr %s335, 32
        %s337 = smul.addr %s336, 8
        %s338 = scalar_lea.vmem %s2, %s337
        %v339 = vld [vmem:[%s328] sm:$0xff]
        %v340 = vlaneseq
        %v341 = vand.u32 %v340, 127
        %vm342 = vcmp.lt.s32.totalorder %v341, 8
        %v343 = vsel %vm342, 0.0, -1e+30
        loop: start=0, step=1, limit=2
        $region49: #{tpu_custom_call.1} parent=47 // loop_pre_header
          _
        $region50: #{tpu_custom_call.1} parent=47 // loop_header
          %s345 = sphi 0, %s349
          %p346 = scmp.ge.s32.totalorder %s345, 2
          %v350 = vphi 0.0, %v752
        $region51: #{tpu_custom_call.1} parent=47 // loop_header_branch
          %348 = sbr.rel (%p346) target = $region55
        $region52: #{tpu_custom_call.1} parent=47 // loop_body
          %s351 = smul.u32 %s345, 32
          %s352 = scalar_lea.vmem %s3, %s351
          %v353 = vld [vmem:[%s352] sm:$0xff]
          %v354 = vld [vmem:[%s352 + $0x8] sm:$0xff]
          %v355 = vld [vmem:[%s352 + $0x10] sm:$0xff]
          %v356 = vld [vmem:[%s352 + $0x18] sm:$0xff]
          %s357 = scalar_lea.vmem %s4, %s345
          %v358 = vld [vmem:[%s357] sm:$0x1]
          %v360 = vlaneseq
          %v361 = vshrl.u32 %v360, 7
          %v362 = vsub.s32 0, %v361
          %v363 = vrot.slane %v358, %v362
          %vm365 = vcmask 261120
          %v367 = vsel %vm365, %v339, 0
          %369 = vmatprep.subr.mxu0 0.0
          %370 = vmatpush1.msra.mxu0 %v353
          %371 = vmatprep.subr.mxu0 0.0
          %372 = vmatpush1.msra.mxu0 %v354
          %373 = vmatprep.subr.mxu0 0.0
          %374 = vmatpush1.msra.mxu0 %v355
          %375 = vmatprep.subr.mxu0 0.0
          %376 = vmatpush1.msra.mxu0 %v356
          %377 = vmatprep.subr.mxu0 0.0
          %378 = vmatpush1.msra.mxu0 0.0
          %379 = vmatprep.subr.mxu0 0.0
          %380 = vmatpush1.msra.mxu0 0.0
          %381 = vmatprep.subr.mxu0 0.0
          %382 = vmatpush1.msra.mxu0 0.0
          %383 = vmatprep.subr.mxu0 0.0
          %384 = vmatpush1.msra.mxu0 0.0
          %385 = vmatprep.subr.mxu0 0.0
          %386 = vmatpush1.msra.mxu0 0.0
          %387 = vmatprep.subr.mxu0 0.0
          %388 = vmatpush1.msra.mxu0 0.0
          %389 = vmatprep.subr.mxu0 0.0
          %390 = vmatpush1.msra.mxu0 0.0
          %391 = vmatprep.subr.mxu0 0.0
          %392 = vmatpush1.msra.mxu0 0.0
          %393 = vmatprep.subr.mxu0 0.0
          %394 = vmatpush1.msra.mxu0 0.0
          %395 = vmatprep.subr.mxu0 0.0
          %396 = vmatpush1.msra.mxu0 0.0
          %397 = vmatprep.subr.mxu0 0.0
          %398 = vmatpush1.msra.mxu0 0.0
          %399 = vmatprep.subr.mxu0 0.0
          %400 = vmatpush1.msra.mxu0 0.0
          %401 = vmatprep.subr.mxu0 0.0
          %402 = vmatpush1.msra.mxu0 0.0
          %403 = vmatprep.subr.mxu0 0.0
          %404 = vmatpush1.msra.mxu0 0.0
          %405 = vmatprep.subr.mxu0 0.0
          %406 = vmatpush1.msra.mxu0 0.0
          %407 = vmatprep.subr.mxu0 0.0
          %408 = vmatpush1.msra.mxu0 0.0
          %409 = vmatprep.subr.mxu0 0.0
          %410 = vmatpush1.msra.mxu0 0.0
          %411 = vmatprep.subr.mxu0 0.0
          %412 = vmatpush1.msra.mxu0 0.0
          %413 = vmatprep.subr.mxu0 0.0
          %414 = vmatpush1.msra.mxu0 0.0
          %415 = vmatprep.subr.mxu0 0.0
          %416 = vmatpush1.msra.mxu0 0.0
          %417 = vmatprep.subr.mxu0 0.0
          %418 = vmatpush1.msra.mxu0 0.0
          %419 = vmatprep.subr.mxu0 0.0
          %420 = vmatpush1.msra.mxu0 0.0
          %421 = vmatprep.subr.mxu0 0.0
          %422 = vmatpush1.msra.mxu0 0.0
          %423 = vmatprep.subr.mxu0 0.0
          %424 = vmatpush1.msra.mxu0 0.0
          %425 = vmatprep.subr.mxu0 0.0
          %426 = vmatpush1.msra.mxu0 0.0
          %427 = vmatprep.subr.mxu0 0.0
          %428 = vmatpush1.msra.mxu0 0.0
          %429 = vmatprep.subr.mxu0 0.0
          %430 = vmatpush1.msra.mxu0 0.0
          %431 = vmatprep.subr.mxu0 0.0
          %432 = vmatpush1.msra.mxu0 0.0
          %433 = vmatprep.mubr.f32.mxu0 0.0
          %434 = vmatmul.mubr.f32.gmra.mrb[0].mxu0 %v367
          %v435 = vpop.f32.mrb[0].mxu0
          %v436 = vadd.f32 %v363, %v435
          %v437 = vpop.f32.mrb[0].mxu0
          %438 = vdwg.mxu0
          %s439 = smul.u32 %s345, 128
          %s440 = scalar_lea.vmem %s333, %s439
          %v441 = vld [vmem:[%s440] sm:$0xff]
          %v442 = vld [vmem:[%s440 + $0x8] sm:$0xff]
          %v443 = vld [vmem:[%s440 + $0x10] sm:$0xff]
          %v444 = vld [vmem:[%s440 + $0x18] sm:$0xff]
          %v445 = vld [vmem:[%s440 + $0x20] sm:$0xff]
          %v446 = vld [vmem:[%s440 + $0x28] sm:$0xff]
          %v447 = vld [vmem:[%s440 + $0x30] sm:$0xff]
          %v448 = vld [vmem:[%s440 + $0x38] sm:$0xff]
          %v449 = vld [vmem:[%s440 + $0x40] sm:$0xff]
          %v450 = vld [vmem:[%s440 + $0x48] sm:$0xff]
          %v451 = vld [vmem:[%s440 + $0x50] sm:$0xff]
          %v452 = vld [vmem:[%s440 + $0x58] sm:$0xff]
          %v453 = vld [vmem:[%s440 + $0x60] sm:$0xff]
          %v454 = vld [vmem:[%s440 + $0x68] sm:$0xff]
          %v455 = vld [vmem:[%s440 + $0x70] sm:$0xff]
          %v456 = vld [vmem:[%s440 + $0x78] sm:$0xff]
          %s457 = scalar_lea.vmem %s338, %s439
          %v458 = vld [vmem:[%s457] sm:$0xff]
          %v459 = vld [vmem:[%s457 + $0x8] sm:$0xff]
          %v460 = vld [vmem:[%s457 + $0x10] sm:$0xff]
          %v461 = vld [vmem:[%s457 + $0x18] sm:$0xff]
          %v462 = vld [vmem:[%s457 + $0x20] sm:$0xff]
          %v463 = vld [vmem:[%s457 + $0x28] sm:$0xff]
          %v464 = vld [vmem:[%s457 + $0x30] sm:$0xff]
          %v465 = vld [vmem:[%s457 + $0x38] sm:$0xff]
          %v466 = vld [vmem:[%s457 + $0x40] sm:$0xff]
          %v467 = vld [vmem:[%s457 + $0x48] sm:$0xff]
          %v468 = vld [vmem:[%s457 + $0x50] sm:$0xff]
          %v469 = vld [vmem:[%s457 + $0x58] sm:$0xff]
          %v470 = vld [vmem:[%s457 + $0x60] sm:$0xff]
          %v471 = vld [vmem:[%s457 + $0x68] sm:$0xff]
          %v472 = vld [vmem:[%s457 + $0x70] sm:$0xff]
          %v473 = vld [vmem:[%s457 + $0x78] sm:$0xff]
          %vm474 = vcmask 130048
          %v476 = vsel %vm474, %v436, 0
          %v479 = vsel %vm474, %v441, 0
          %v482 = vsel %vm474, %v442, 0
          %v485 = vsel %vm474, %v443, 0
          %v488 = vsel %vm474, %v444, 0
          %v491 = vsel %vm474, %v445, 0
          %v494 = vsel %vm474, %v446, 0
          %v497 = vsel %vm474, %v447, 0
          %v500 = vsel %vm474, %v448, 0
          %v503 = vsel %vm474, %v449, 0
          %v506 = vsel %vm474, %v450, 0
          %v509 = vsel %vm474, %v451, 0
          %v512 = vsel %vm474, %v452, 0
          %v515 = vsel %vm474, %v453, 0
          %v518 = vsel %vm474, %v454, 0
          %v521 = vsel %vm474, %v455, 0
          %v524 = vsel %vm474, %v456, 0
          %526 = vmatprep.subr.mxu0 0.0
          %527 = vmatpush1.xpose.msra.mxu0 %v479
          %528 = vmatprep.subr.mxu0 0.0
          %529 = vmatpush1.xpose.msra.mxu0 %v482
          %530 = vmatprep.subr.mxu0 0.0
          %531 = vmatpush1.xpose.msra.mxu0 %v485
          %532 = vmatprep.subr.mxu0 0.0
          %533 = vmatpush1.xpose.msra.mxu0 %v488
          %534 = vmatprep.subr.mxu0 0.0
          %535 = vmatpush1.xpose.msra.mxu0 %v491
          %536 = vmatprep.subr.mxu0 0.0
          %537 = vmatpush1.xpose.msra.mxu0 %v494
          %538 = vmatprep.subr.mxu0 0.0
          %539 = vmatpush1.xpose.msra.mxu0 %v497
          %540 = vmatprep.subr.mxu0 0.0
          %541 = vmatpush1.xpose.msra.mxu0 %v500
          %542 = vmatprep.subr.mxu0 0.0
          %543 = vmatpush1.xpose.msra.mxu0 %v503
          %544 = vmatprep.subr.mxu0 0.0
          %545 = vmatpush1.xpose.msra.mxu0 %v506
          %546 = vmatprep.subr.mxu0 0.0
          %547 = vmatpush1.xpose.msra.mxu0 %v509
          %548 = vmatprep.subr.mxu0 0.0
          %549 = vmatpush1.xpose.msra.mxu0 %v512
          %550 = vmatprep.subr.mxu0 0.0
          %551 = vmatpush1.xpose.msra.mxu0 %v515
          %552 = vmatprep.subr.mxu0 0.0
          %553 = vmatpush1.xpose.msra.mxu0 %v518
          %554 = vmatprep.subr.mxu0 0.0
          %555 = vmatpush1.xpose.msra.mxu0 %v521
          %556 = vmatprep.subr.mxu0 0.0
          %557 = vmatpush1.xpose.msra.mxu0 %v524
          %558 = vmatprep.subr.mxu0 0.0
          %559 = vmatpush1.xpose.msra.mxu0 0.0
          %560 = vmatprep.subr.mxu0 0.0
          %561 = vmatpush1.xpose.msra.mxu0 0.0
          %562 = vmatprep.subr.mxu0 0.0
          %563 = vmatpush1.xpose.msra.mxu0 0.0
          %564 = vmatprep.subr.mxu0 0.0
          %565 = vmatpush1.xpose.msra.mxu0 0.0
          %566 = vmatprep.subr.mxu0 0.0
          %567 = vmatpush1.xpose.msra.mxu0 0.0
          %568 = vmatprep.subr.mxu0 0.0
          %569 = vmatpush1.xpose.msra.mxu0 0.0
          %570 = vmatprep.subr.mxu0 0.0
          %571 = vmatpush1.xpose.msra.mxu0 0.0
          %572 = vmatprep.subr.mxu0 0.0
          %573 = vmatpush1.xpose.msra.mxu0 0.0
          %574 = vmatprep.subr.mxu0 0.0
          %575 = vmatpush1.xpose.msra.mxu0 0.0
          %576 = vmatprep.subr.mxu0 0.0
          %577 = vmatpush1.xpose.msra.mxu0 0.0
          %578 = vmatprep.subr.mxu0 0.0
          %579 = vmatpush1.xpose.msra.mxu0 0.0
          %580 = vmatprep.subr.mxu0 0.0
          %581 = vmatpush1.xpose.msra.mxu0 0.0
          %582 = vmatprep.subr.mxu0 0.0
          %583 = vmatpush1.xpose.msra.mxu0 0.0
          %584 = vmatprep.subr.mxu0 0.0
          %585 = vmatpush1.xpose.msra.mxu0 0.0
          %586 = vmatprep.subr.mxu0 0.0
          %587 = vmatpush1.xpose.msra.mxu0 0.0
          %588 = vmatprep.subr.mxu0 0.0
          %589 = vmatpush1.xpose.msra.mxu0 0.0
          %590 = vmatprep.mubr.f32.mxu0 0.0
          %591 = vmatmul.mubr.f32.gmra.mrb[0].mxu0 %v476
          %v592 = vpop.f32.mrb[0].mxu0
          %v593 = vadd.f32 %v343, %v592
          %v594 = vpop.f32.mrb[0].mxu0
          %595 = vdwg.mxu0
          %596 = vmax.xlane.f32.xlu0 %v593
          %v597 = vpop.xlane.xlu0 %596
          %v598 = vsub.f32 %v593, %v597
          %v599 = vmul.f32 %v598, 1.442695
          %v600 = vpow.pop %v599
          %601 = vadd.xlane.f32.xlu0 %v600
          %v602 = vpop.xlane.xlu0 %601
          %603 = vmatprep.subr.mxu0 0.0
          %604 = vmatpush1.msra.mxu0 %v458
          %605 = vmatprep.subr.mxu0 0.0
          %606 = vmatpush1.msra.mxu0 %v459
          %607 = vmatprep.subr.mxu0 0.0
          %608 = vmatpush1.msra.mxu0 %v460
          %609 = vmatprep.subr.mxu0 0.0
          %610 = vmatpush1.msra.mxu0 %v461
          %611 = vmatprep.subr.mxu0 0.0
          %612 = vmatpush1.msra.mxu0 %v462
          %613 = vmatprep.subr.mxu0 0.0
          %614 = vmatpush1.msra.mxu0 %v463
          %615 = vmatprep.subr.mxu0 0.0
          %616 = vmatpush1.msra.mxu0 %v464
          %617 = vmatprep.subr.mxu0 0.0
          %618 = vmatpush1.msra.mxu0 %v465
          %619 = vmatprep.subr.mxu0 0.0
          %620 = vmatpush1.msra.mxu0 %v466
          %621 = vmatprep.subr.mxu0 0.0
          %622 = vmatpush1.msra.mxu0 %v467
          %623 = vmatprep.subr.mxu0 0.0
          %624 = vmatpush1.msra.mxu0 %v468
          %625 = vmatprep.subr.mxu0 0.0
          %626 = vmatpush1.msra.mxu0 %v469
          %627 = vmatprep.subr.mxu0 0.0
          %628 = vmatpush1.msra.mxu0 %v470
          %629 = vmatprep.subr.mxu0 0.0
          %630 = vmatpush1.msra.mxu0 %v471
          %631 = vmatprep.subr.mxu0 0.0
          %632 = vmatpush1.msra.mxu0 %v472
          %633 = vmatprep.subr.mxu0 0.0
          %634 = vmatpush1.msra.mxu0 %v473
          %635 = vmatprep.subr.mxu0 0.0
          %636 = vmatpush1.msra.mxu0 0.0
          %637 = vmatprep.subr.mxu0 0.0
          %638 = vmatpush1.msra.mxu0 0.0
          %639 = vmatprep.subr.mxu0 0.0
          %640 = vmatpush1.msra.mxu0 0.0
          %641 = vmatprep.subr.mxu0 0.0
          %642 = vmatpush1.msra.mxu0 0.0
          %643 = vmatprep.subr.mxu0 0.0
          %644 = vmatpush1.msra.mxu0 0.0
          %645 = vmatprep.subr.mxu0 0.0
          %646 = vmatpush1.msra.mxu0 0.0
          %647 = vmatprep.subr.mxu0 0.0
          %648 = vmatpush1.msra.mxu0 0.0
          %649 = vmatprep.subr.mxu0 0.0
          %650 = vmatpush1.msra.mxu0 0.0
          %651 = vmatprep.subr.mxu0 0.0
          %652 = vmatpush1.msra.mxu0 0.0
          %653 = vmatprep.subr.mxu0 0.0
          %654 = vmatpush1.msra.mxu0 0.0
          %655 = vmatprep.subr.mxu0 0.0
          %656 = vmatpush1.msra.mxu0 0.0
          %657 = vmatprep.subr.mxu0 0.0
          %658 = vmatpush1.msra.mxu0 0.0
          %659 = vmatprep.subr.mxu0 0.0
          %660 = vmatpush1.msra.mxu0 0.0
          %661 = vmatprep.subr.mxu0 0.0
          %662 = vmatpush1.msra.mxu0 0.0
          %663 = vmatprep.subr.mxu0 0.0
          %664 = vmatpush1.msra.mxu0 0.0
          %665 = vmatprep.subr.mxu0 0.0
          %666 = vmatpush1.msra.mxu0 0.0
          %667 = vmatprep.mubr.f32.mxu0 0.0
          %668 = vmatmul.mubr.f32.gmra.mrb[0].mxu0 %v600
          %v669 = vpop.f32.mrb[0].mxu0
          %v670 = vadd.f32 0.0, %v669
          %v671 = vpop.f32.mrb[0].mxu0
          %672 = vdwg.mxu0
          %v673 = vrcp.pop %v602
          %v674 = vmul.f32 %v670, %v673
          %s675 = smul.u32 %s345, 16
          %s676 = scalar_lea.vmem %s5, %s675
          %v677 = vld [vmem:[%s676] sm:$0xff]
          %v678 = vld [vmem:[%s676 + $0x8] sm:$0xff]
          %v680 = vsel %vm474, %v674, 0
          %682 = vmatprep.subr.mxu0 0.0
          %683 = vmatpush1.msra.mxu0 %v677
          %684 = vmatprep.subr.mxu0 0.0
          %685 = vmatpush1.msra.mxu0 %v678
          %686 = vmatprep.subr.mxu0 0.0
          %687 = vmatpush1.msra.mxu0 0.0
          %688 = vmatprep.subr.mxu0 0.0
          %689 = vmatpush1.msra.mxu0 0.0
          %690 = vmatprep.subr.mxu0 0.0
          %691 = vmatpush1.msra.mxu0 0.0
          %692 = vmatprep.subr.mxu0 0.0
          %693 = vmatpush1.msra.mxu0 0.0
          %694 = vmatprep.subr.mxu0 0.0
          %695 = vmatpush1.msra.mxu0 0.0
          %696 = vmatprep.subr.mxu0 0.0
          %697 = vmatpush1.msra.mxu0 0.0
          %698 = vmatprep.subr.mxu0 0.0
          %699 = vmatpush1.msra.mxu0 0.0
          %700 = vmatprep.subr.mxu0 0.0
          %701 = vmatpush1.msra.mxu0 0.0
          %702 = vmatprep.subr.mxu0 0.0
          %703 = vmatpush1.msra.mxu0 0.0
          %704 = vmatprep.subr.mxu0 0.0
          %705 = vmatpush1.msra.mxu0 0.0
          %706 = vmatprep.subr.mxu0 0.0
          %707 = vmatpush1.msra.mxu0 0.0
          %708 = vmatprep.subr.mxu0 0.0
          %709 = vmatpush1.msra.mxu0 0.0
          %710 = vmatprep.subr.mxu0 0.0
          %711 = vmatpush1.msra.mxu0 0.0
          %712 = vmatprep.subr.mxu0 0.0
          %713 = vmatpush1.msra.mxu0 0.0
          %714 = vmatprep.subr.mxu0 0.0
          %715 = vmatpush1.msra.mxu0 0.0
          %716 = vmatprep.subr.mxu0 0.0
          %717 = vmatpush1.msra.mxu0 0.0
          %718 = vmatprep.subr.mxu0 0.0
          %719 = vmatpush1.msra.mxu0 0.0
          %720 = vmatprep.subr.mxu0 0.0
          %721 = vmatpush1.msra.mxu0 0.0
          %722 = vmatprep.subr.mxu0 0.0
          %723 = vmatpush1.msra.mxu0 0.0
          %724 = vmatprep.subr.mxu0 0.0
          %725 = vmatpush1.msra.mxu0 0.0
          %726 = vmatprep.subr.mxu0 0.0
          %727 = vmatpush1.msra.mxu0 0.0
          %728 = vmatprep.subr.mxu0 0.0
          %729 = vmatpush1.msra.mxu0 0.0
          %730 = vmatprep.subr.mxu0 0.0
          %731 = vmatpush1.msra.mxu0 0.0
          %732 = vmatprep.subr.mxu0 0.0
          %733 = vmatpush1.msra.mxu0 0.0
          %734 = vmatprep.subr.mxu0 0.0
          %735 = vmatpush1.msra.mxu0 0.0
          %736 = vmatprep.subr.mxu0 0.0
          %737 = vmatpush1.msra.mxu0 0.0
          %738 = vmatprep.subr.mxu0 0.0
          %739 = vmatpush1.msra.mxu0 0.0
          %740 = vmatprep.subr.mxu0 0.0
          %741 = vmatpush1.msra.mxu0 0.0
          %742 = vmatprep.subr.mxu0 0.0
          %743 = vmatpush1.msra.mxu0 0.0
          %744 = vmatprep.subr.mxu0 0.0
          %745 = vmatpush1.msra.mxu0 0.0
          %746 = vmatprep.mubr.f32.mxu0 0.0
          %747 = vmatmul.mubr.f32.gmra.mrb[0].mxu0 %v680
          %v748 = vpop.f32.mrb[0].mxu0
          %v749 = vadd.f32 0.0, %v748
          %v750 = vpop.f32.mrb[0].mxu0
          %751 = vdwg.mxu0
          %v752 = vadd.f32 %v350, %v749
        $region53: #{tpu_custom_call.1} parent=47 // loop_footer
          %s349 = sadd.s32 1, %s345
        $region54: #{tpu_custom_call.1} parent=47 // loop_footer_branch
          %344 = sbr.rel target = $region50
        $region55: #{tpu_custom_call.1} parent=47 // loop_exit
          _
        %v753 = vld [vmem:[%s6] sm:$0x1]
        %v755 = vlaneseq
        %v756 = vshrl.u32 %v755, 7
        %v757 = vsub.s32 0, %v756
        %v758 = vrot.slane %v753, %v757
        %v760 = vadd.f32 %v350, %v758
        %vm761 = vcmask 261120
        %762 = vst.msk [vmem:[%s321] sm:$0xff] %vm761, %v760
        %s763 = sand.u32 %s207, 1
        %s764 = scalar_lea.sflag [#allocation3], %s763
        %s765 = sand.u32 %s207, 1
        %s766 = smul.addr %s765, 8
        %s767 = scalar_lea.vmem [#allocation2], %s766
        // Predicated region
        $region56: #{tpu_custom_call.1} parent=47 // pred_check
          %p768 = pneg %p217
        $region57: #{tpu_custom_call.1} parent=47 // pred_check_branch
          %770 = sbr.rel (%p768) target = $region59
        $region58: #{tpu_custom_call.1} parent=47 // pred_region
          %s772 = ssub.s32 128, 128
          %773 = vsyncadd %s764, %s772
          %s774 = sadd.s32 %s26, %s25
          %s775 = smul.addr %s774, 128
          %s776 = scalar_lea.hbm %s7, %s775
          %s778 = sshll.u32 %s767, 4
          %s779 = int_to_ptr.vmem [resolvable:$true] %s778
          %781 = dma.vmem_to_hbm [thread:$0]  %s779, 128, %s776, %s764
        $region59: #{tpu_custom_call.1} parent=47 // pred_fallthru
          _
      $region48: #{tpu_custom_call.1} parent=5 // pred_fallthru
        _
      %p782 = scmp.le.s32.totalorder 2, %s16
      // Predicated region
      $region60: #{tpu_custom_call.1} parent=5 // pred_check
        %p783 = pneg %p782
      $region61: #{tpu_custom_call.1} parent=5 // pred_check_branch
        %785 = sbr.rel (%p783) target = $region63
      $region62: #{tpu_custom_call.1} parent=5 // pred_region
        %s786 = ssub.s32 %s16, 2
        // Predicated region
        $region64: #{tpu_custom_call.1} parent=62 // pred_check
          %p787 = pneg %p223
        $region65: #{tpu_custom_call.1} parent=62 // pred_check_branch
          %789 = sbr.rel (%p787) target = $region67
        $region66: #{tpu_custom_call.1} parent=62 // pred_region
          %s790 = sand.u32 %s208, 1
          %s791 = scalar_lea.sflag [#allocation3], %s790
          %s792 = sand.u32 %s208, 1
          %s793 = smul.addr %s792, 8
          %s794 = scalar_lea.vmem [#allocation2], %s793
          %795 = dma.done %s791, 128
        $region67: #{tpu_custom_call.1} parent=62 // pred_fallthru
          _
      $region63: #{tpu_custom_call.1} parent=5 // pred_fallthru
        _
    $region6: #{tpu_custom_call.1} parent=1 // loop_footer
      %s20 = sadd.s32 1, %s16
    $region7: #{tpu_custom_call.1} parent=1 // loop_footer_branch
      %15 = sbr.rel target = $region3
    $region8: #{tpu_custom_call.1} parent=1 // loop_exit
      _
    %796 = vsyncpa [#allocation3], 1
    %s797 = scalar_lea.sflag [#allocation3], 1
    %798 = vsyncpa %s797, 1

</llo_original>
